<compile_context>
chip_gen: v7x
topology: tpu7x:2x2x1
jax: 0.10.0
libtpu: 0.0.40
codegen_flags: <defaults>
</compile_context>

<pallas_src>
import functools

import jax
import jax.numpy as jnp
from jax.experimental import pallas as pl
from jax.experimental.pallas import tpu as pltpu


def _round_up(x, m):
    return (x + m - 1) // m * m


def _pick_k_tile(kp):
    # Only used when Kp > 1024; Kp is always a multiple of 128.
    for tk in (512, 256, 128):
        if kp % tk == 0:
            return tk
    return 128


def _choose_m_tile(m):
    # Multiples of 16 (bf16 packs 16 rows per sublane group); for small M make
    # at least 2 blocks so a "parallel" axis can feed both v7x TensorCores.
    if m >= 1024:
        tm = 512
    elif m >= 512:
        tm = 256
    elif m >= 256:
        tm = 128
    elif m >= 32:
        tm = _round_up(-(-m // 2), 16)
    else:
        tm = _round_up(m, 16)
    return tm, _round_up(m, tm)


# ----------------------------------------------------------------------------
# Kernels: out = prelu(x @ w_folded + shift, alpha); BN scale folded into w.
# sa_ref row 0 = shift, row 1 = prelu alpha.
# ----------------------------------------------------------------------------
def _resident_kernel(x_ref, w_ref, sa_ref, o_ref):
    # Fast path: whole weight resident in VMEM, single matmul, no revisits.
    acc = jnp.dot(x_ref[...], w_ref[...], preferred_element_type=jnp.float32)
    y = acc + sa_ref[0:1, :]
    o_ref[...] = jnp.where(y > 0, y, sa_ref[1:2, :] * y).astype(o_ref.dtype)


def _tiled_kernel(x_ref, w_ref, sa_ref, o_ref, acc_ref):
    # General path: K-gridded with f32 scratch accumulator, bf16 store.
    k = pl.program_id(2)

    @pl.when(k == 0)
    def _():
        acc_ref[...] = jnp.zeros_like(acc_ref)

    acc_ref[...] += jnp.dot(x_ref[...], w_ref[...],
                            preferred_element_type=jnp.float32)

    @pl.when(k == pl.num_programs(2) - 1)
    def _():
        y = acc_ref[...] + sa_ref[0:1, :]
        o_ref[...] = jnp.where(y > 0, y, sa_ref[1:2, :] * y).astype(o_ref.dtype)


def fused_matmul_shift_prelu(patches, wk, shift_alpha, n_out, *, force_tiled=False):
    """patches:(M,K) bf16, wk:(Kp,Np) bf16 (scale-folded, pre-padded),
    shift_alpha:(2,Np) f32.  Returns (M, n_out) bf16."""
    M, K = patches.shape
    Kp, Np = wk.shape
    tm, Mp = _choose_m_tile(M)
    xp = jnp.pad(patches, ((0, Mp - M), (0, Kp - K)))   # stays bf16

    small_weight = (not force_tiled and Kp * Np * 2 <= 4 * 1024 * 1024
                    and Np <= 512 and Kp <= 2048)

    if small_weight:
        grid = (Mp // tm,)
        est = (2 * tm * Kp * 2        # activation tiles, double-buffered
               + Kp * Np * 2          # resident weight
               + 2 * Np * 4           # shift/alpha
               + 2 * tm * Np * 2)     # bf16 output, double-buffered
        vmem_limit = int(min(48 * 1024 * 1024, max(16 * 1024 * 1024, 2 * est)))
        out = pl.pallas_call(
            _resident_kernel,
            out_shape=jax.ShapeDtypeStruct((Mp, Np), jnp.bfloat16),
            grid_spec=pltpu.PrefetchScalarGridSpec(
                num_scalar_prefetch=0,
                grid=grid,
                in_specs=[
                    pl.BlockSpec((tm, Kp), lambda i: (i, 0)),   # bf16 patches
                    pl.BlockSpec((Kp, Np), lambda i: (0, 0)),   # resident weight
                    pl.BlockSpec((2, Np), lambda i: (0, 0)),    # shift + alpha
                ],
                out_specs=pl.BlockSpec((tm, Np), lambda i: (i, 0)),
            ),
            compiler_params=pltpu.CompilerParams(
                dimension_semantics=("parallel",),
                vmem_limit_bytes=vmem_limit),
        )(xp, wk, shift_alpha)
    else:
        tk = Kp if Kp <= 1024 else _pick_k_tile(Kp)
        tn = 256 if Np % 256 == 0 else 128
        grid = (Mp // tm, Np // tn, Kp // tk)
        est = (2 * tm * tk * 2 + 2 * tk * tn * 2 + 2 * 2 * tn * 4
               + 2 * tm * tn * 2 + tm * tn * 4)
        vmem_limit = int(min(48 * 1024 * 1024, max(16 * 1024 * 1024, 2 * est)))
        out = pl.pallas_call(
            _tiled_kernel,
            out_shape=jax.ShapeDtypeStruct((Mp, Np), jnp.bfloat16),
            grid_spec=pltpu.PrefetchScalarGridSpec(
                num_scalar_prefetch=0,
                grid=grid,
                in_specs=[
                    pl.BlockSpec((tm, tk), lambda i, j, k: (i, k)),
                    pl.BlockSpec((tk, tn), lambda i, j, k: (k, j)),
                    pl.BlockSpec((2, tn), lambda i, j, k: (0, j)),
                ],
                out_specs=pl.BlockSpec((tm, tn), lambda i, j, k: (i, j)),
                scratch_shapes=[pltpu.VMEM((tm, tn), jnp.float32)],
            ),
            compiler_params=pltpu.CompilerParams(
                dimension_semantics=("parallel", "parallel", "arbitrary"),
                vmem_limit_bytes=vmem_limit),
        )(xp, wk, shift_alpha)
    return out[:M, :n_out]


# ----------------------------------------------------------------------------
# im2col glue (XLA slicing; ordering (kh, kw, cin) matches the weight reshape)
# ----------------------------------------------------------------------------
def _im2col(x_nhwc, ksize, stride, padding):
    N, H, W, Cin = x_nhwc.shape
    xp = jnp.pad(x_nhwc, ((0, 0), (padding, padding), (padding, padding), (0, 0)))
    Ho = (H + 2 * padding - ksize) // stride + 1
    Wo = (W + 2 * padding - ksize) // stride + 1
    cols = []
    for kh in range(ksize):
        for kw in range(ksize):
            cols.append(xp[:, kh:kh + stride * (Ho - 1) + 1:stride,
                           kw:kw + stride * (Wo - 1) + 1:stride, :])
    patches = jnp.stack(cols, axis=3).reshape(N * Ho * Wo, ksize * ksize * Cin)
    return patches, N, Ho, Wo


# ----------------------------------------------------------------------------
# CNNBlock parameters: conv + BN folded, weights pre-padded/reshaped, bf16
# ----------------------------------------------------------------------------
def init_cnnblock(key, cin, cout, ksize, eps=1e-5):
    ks = jax.random.split(key, 6)
    fan_in = ksize * ksize * cin
    w = jax.random.normal(ks[0], (ksize, ksize, cin, cout), jnp.float32) / jnp.sqrt(fan_in)
    b = 0.05 * jax.random.normal(ks[1], (cout,), jnp.float32)            # conv bias
    gamma = 1.0 + 0.1 * jax.random.normal(ks[2], (cout,), jnp.float32)
    beta = 0.1 * jax.random.normal(ks[3], (cout,), jnp.float32)
    run_mean = 0.05 * jax.random.normal(ks[4], (cout,), jnp.float32)
    run_var = 0.9 + 0.1 * jax.nn.sigmoid(jax.random.normal(ks[5], (cout,), jnp.float32))

    scale = gamma / jnp.sqrt(run_var + eps)        # fold BN into weights
    shift = (b - run_mean) * scale + beta

    K = ksize * ksize * cin
    Kp = _round_up(K, 128)
    Np = _round_up(cout, 128)
    w_folded = (w * scale).reshape(K, cout)
    wk = jnp.pad(w_folded, ((0, Kp - K), (0, Np - cout))).astype(jnp.bfloat16)
    shift_row = jnp.pad(shift, (0, Np - cout))
    # TODO(synk): torch nn.PReLU() defaults to one shared alpha; per-channel
    # alpha of 0.25 is identical at init but diverges if alphas are learned.
    alpha_row = jnp.full((Np,), 0.25, jnp.float32)
    shift_alpha = jnp.stack([shift_row, alpha_row], axis=0)   # (2, Np) f32
    return {"wk": wk, "shift_alpha": shift_alpha}


def cnn_block_apply_nhwc(x_nhwc, params, *, ksize, cout, stride, padding,
                         force_tiled=False):
    """CNNBlock on NHWC bf16 activations -> NHWC bf16 (for chaining blocks)."""
    patches, N, Ho, Wo = _im2col(x_nhwc, ksize, stride, padding)
    out = fused_matmul_shift_prelu(patches, params["wk"], params["shift_alpha"],
                                   cout, force_tiled=force_tiled)
    return out.reshape(N, Ho, Wo, cout)


def cnn_block_forward(x_nchw, params, *, ksize, cout, stride, padding):
    """Torch-layout wrapper: NCHW f32 in, NCHW out (single block)."""
    x = jnp.transpose(x_nchw, (0, 2, 3, 1)).astype(jnp.bfloat16)
    y = cnn_block_apply_nhwc(x, params, ksize=ksize, cout=cout,
                             stride=stride, padding=padding)
    return jnp.transpose(y, (0, 3, 1, 2))


# Pure-JAX reference on the same bf16-quantized operands (correctness check).
def cnn_block_reference_nhwc(x_nhwc, params, *, ksize, cout, stride, padding):
    patches, N, Ho, Wo = _im2col(x_nhwc, ksize, stride, padding)
    K = patches.shape[1]
    w = params["wk"].astype(jnp.float32)[:K, :cout]
    shift = params["shift_alpha"][0, :cout]
    alpha = params["shift_alpha"][1, :cout]
    y = jnp.dot(patches.astype(jnp.float32), w) + shift
    y = jnp.where(y > 0, y, alpha * y).astype(jnp.bfloat16)
    return y.reshape(N, Ho, Wo, cout)


if __name__ == "__main__":
    key = jax.random.PRNGKey(0)
    kx, k1, k2 = jax.random.split(key, 3)
    x_nchw = jax.random.normal(kx, (2, 4, 16, 16), jnp.float32)   # NCHW

    # CNNBlock(4, 32, kernel_size=3, stride=1, padding=1)
    p1 = init_cnnblock(k1, cin=4, cout=32, ksize=3)
    # CNNBlock(32, 256, kernel_size=3, stride=2, padding=1)
    p2 = init_cnnblock(k2, cin=32, cout=256, ksize=3)

    blk1 = functools.partial(cnn_block_apply_nhwc, ksize=3, cout=32,
                             stride=1, padding=1)
    blk2 = functools.partial(cnn_block_apply_nhwc, ksize=3, cout=256,
                             stride=2, padding=1)

    @jax.jit
    def model(x, p1, p2):
        # NCHW <-> NHWC only at the boundary; blocks chain in NHWC bf16.
        h = jnp.transpose(x, (0, 2, 3, 1)).astype(jnp.bfloat16)
        y1 = blk1(h, p1)
        y2 = blk2(y1, p2)
        return y1, jnp.transpose(y2, (0, 3, 1, 2))

    y1_nhwc, y2_nchw = jax.block_until_ready(model(x_nchw, p1, p2))
    assert y1_nhwc.shape == (2, 16, 16, 32), y1_nhwc.shape
    assert y2_nchw.shape == (2, 256, 8, 8), y2_nchw.shape
    assert bool(jnp.all(jnp.isfinite(y1_nhwc.astype(jnp.float32))))
    assert bool(jnp.all(jnp.isfinite(y2_nchw.astype(jnp.float32))))

    x_nhwc = jnp.transpose(x_nchw, (0, 2, 3, 1)).astype(jnp.bfloat16)
    r1 = cnn_block_reference_nhwc(x_nhwc, p1, ksize=3, cout=32, stride=1, padding=1)
    r2 = cnn_block_reference_nhwc(y1_nhwc, p2, ksize=3, cout=256, stride=2, padding=1)
    y2_nhwc = jnp.transpose(y2_nchw, (0, 2, 3, 1))
    assert bool(jnp.allclose(y1_nhwc.astype(jnp.float32), r1.astype(jnp.float32),
                             atol=3e-2, rtol=3e-2))
    assert bool(jnp.allclose(y2_nhwc.astype(jnp.float32), r2.astype(jnp.float32),
                             atol=3e-2, rtol=3e-2))

    # Also exercise the general tiled (K-gridded, scratch-accumulator) path.
    y2_tiled = jax.jit(functools.partial(cnn_block_apply_nhwc, ksize=3, cout=256,
                                         stride=2, padding=1, force_tiled=True)
                       )(y1_nhwc, p2)
    y2_tiled = jax.block_until_ready(y2_tiled)
    assert bool(jnp.allclose(y2_tiled.astype(jnp.float32), r2.astype(jnp.float32),
                             atol=3e-2, rtol=3e-2))

    print("KERNEL_OK")
</pallas_src>

<mosaic_0001>
module attributes {stable_mosaic.version = 11 : i64} {
  func.func @_resident_kernel(%arg0: i32, %arg1: memref<256x128xbf16, #tpu.memory_space<vmem>>, %arg2: memref<128x128xbf16, #tpu.memory_space<vmem>>, %arg3: memref<2x128xf32, #tpu.memory_space<vmem>>, %arg4: memref<256x128xbf16, #tpu.memory_space<vmem>>) attributes {dimension_semantics = [#tpu.dimension_semantics<parallel>], iteration_bounds = array<i64: 2>, scalar_prefetch = 0 : i64, scratch_operands = 0 : i64, tpu.core_type = #tpu.core_type<tc>, window_params = [{transform_indices = @transform_0, window_bounds = array<i64: 256, 128>}, {pipeline_mode = #tpu.pipeline_mode<synchronous>, transform_indices = @transform_1, window_bounds = array<i64: 128, 128>}, {pipeline_mode = #tpu.pipeline_mode<synchronous>, transform_indices = @transform_2, window_bounds = array<i64: 2, 128>}, {transform_indices = @transform_3, window_bounds = array<i64: 256, 128>}]} {
    %c0 = arith.constant 0 : index
    %c0_0 = arith.constant 0 : index
    %0 = vector.load %arg1[%c0, %c0_0] : memref<256x128xbf16, #tpu.memory_space<vmem>>, vector<256x128xbf16>
    %c0_1 = arith.constant 0 : index
    %c0_2 = arith.constant 0 : index
    %1 = vector.load %arg2[%c0_1, %c0_2] : memref<128x128xbf16, #tpu.memory_space<vmem>>, vector<128x128xbf16>
    %cst = arith.constant dense<0.000000e+00> : vector<256x128xf32>
    %2 = tpu.matmul %0, %1, %cst {dimension_numbers = #tpu.dot_dimension_numbers<[1], [0], [0], [1], [0, 0, 1, 1], [], []>} : vector<256x128xbf16>, vector<128x128xbf16>, vector<256x128xf32> -> vector<256x128xf32>
    %c0_3 = arith.constant 0 : index
    %c0_4 = arith.constant 0 : index
    %3 = vector.load %arg3[%c0_3, %c0_4] : memref<2x128xf32, #tpu.memory_space<vmem>>, vector<1x128xf32>
    %4 = vector.broadcast %3 : vector<1x128xf32> to vector<256x128xf32>
    %5 = arith.addf %2, %4 : vector<256x128xf32>
    %cst_5 = arith.constant 0.000000e+00 : f32
    %6 = vector.broadcast %cst_5 : f32 to vector<256x128xf32>
    %7 = arith.cmpf ogt, %5, %6 : vector<256x128xf32>
    %c1 = arith.constant 1 : index
    %c0_6 = arith.constant 0 : index
    %8 = vector.load %arg3[%c1, %c0_6] : memref<2x128xf32, #tpu.memory_space<vmem>>, vector<1x128xf32>
    %9 = vector.broadcast %8 : vector<1x128xf32> to vector<256x128xf32>
    %10 = arith.mulf %9, %5 : vector<256x128xf32>
    %11 = arith.select %7, %5, %10 : vector<256x128xi1>, vector<256x128xf32>
    %12 = arith.truncf %11 : vector<256x128xf32> to vector<256x128xbf16>
    %c0_7 = arith.constant 0 : index
    %c0_8 = arith.constant 0 : index
    %13 = vector.load %arg4[%c0_7, %c0_8] : memref<256x128xbf16, #tpu.memory_space<vmem>>, vector<256x128xbf16>
    tpu.vector_store %arg4[%c0_7, %c0_8], %12 {strides = array<i32>} : memref<256x128xbf16, #tpu.memory_space<vmem>>, vector<256x128xbf16>,
    return
  }
  func.func @transform_0(%arg0: i32) -> (i32, i32) {
    %c0_i32 = arith.constant 0 : i32
    %c0_i32_0 = arith.constant 0 : i32
    return %arg0, %c0_i32 : i32, i32
  }
  func.func @transform_1(%arg0: i32) -> (i32, i32) {
    %c0_i32 = arith.constant 0 : i32
    %c0_i32_0 = arith.constant 0 : i32
    %c0_i32_1 = arith.constant 0 : i32
    return %c0_i32, %c0_i32_0 : i32, i32
  }
  func.func @transform_2(%arg0: i32) -> (i32, i32) {
    %c0_i32 = arith.constant 0 : i32
    %c0_i32_0 = arith.constant 0 : i32
    %c0_i32_1 = arith.constant 0 : i32
    return %c0_i32, %c0_i32_0 : i32, i32
  }
  func.func @transform_3(%arg0: i32) -> (i32, i32) {
    %c0_i32 = arith.constant 0 : i32
    %c0_i32_0 = arith.constant 0 : i32
    return %arg0, %c0_i32 : i32, i32
  }
}

module attributes {stable_mosaic.version = 11 : i64} {
  func.func @_resident_kernel(%arg0: i32, %arg1: memref<64x384xbf16, #tpu.memory_space<vmem>>, %arg2: memref<384x256xbf16, #tpu.memory_space<vmem>>, %arg3: memref<2x256xf32, #tpu.memory_space<vmem>>, %arg4: memref<64x256xbf16, #tpu.memory_space<vmem>>) attributes {dimension_semantics = [#tpu.dimension_semantics<parallel>], iteration_bounds = array<i64: 2>, scalar_prefetch = 0 : i64, scratch_operands = 0 : i64, tpu.core_type = #tpu.core_type<tc>, window_params = [{transform_indices = @transform_0, window_bounds = array<i64: 64, 384>}, {pipeline_mode = #tpu.pipeline_mode<synchronous>, transform_indices = @transform_1, window_bounds = array<i64: 384, 256>}, {pipeline_mode = #tpu.pipeline_mode<synchronous>, transform_indices = @transform_2, window_bounds = array<i64: 2, 256>}, {transform_indices = @transform_3, window_bounds = array<i64: 64, 256>}]} {
    %c0 = arith.constant 0 : index
    %c0_0 = arith.constant 0 : index
    %0 = vector.load %arg1[%c0, %c0_0] : memref<64x384xbf16, #tpu.memory_space<vmem>>, vector<64x384xbf16>
    %c0_1 = arith.constant 0 : index
    %c0_2 = arith.constant 0 : index
    %1 = vector.load %arg2[%c0_1, %c0_2] : memref<384x256xbf16, #tpu.memory_space<vmem>>, vector<384x256xbf16>
    %cst = arith.constant dense<0.000000e+00> : vector<64x256xf32>
    %2 = tpu.matmul %0, %1, %cst {dimension_numbers = #tpu.dot_dimension_numbers<[1], [0], [0], [1], [0, 0, 1, 1], [], []>} : vector<64x384xbf16>, vector<384x256xbf16>, vector<64x256xf32> -> vector<64x256xf32>
    %c0_3 = arith.constant 0 : index
    %c0_4 = arith.constant 0 : index
    %3 = vector.load %arg3[%c0_3, %c0_4] : memref<2x256xf32, #tpu.memory_space<vmem>>, vector<1x256xf32>
    %4 = vector.broadcast %3 : vector<1x256xf32> to vector<64x256xf32>
    %5 = arith.addf %2, %4 : vector<64x256xf32>
    %cst_5 = arith.constant 0.000000e+00 : f32
    %6 = vector.broadcast %cst_5 : f32 to vector<64x256xf32>
    %7 = arith.cmpf ogt, %5, %6 : vector<64x256xf32>
    %c1 = arith.constant 1 : index
    %c0_6 = arith.constant 0 : index
    %8 = vector.load %arg3[%c1, %c0_6] : memref<2x256xf32, #tpu.memory_space<vmem>>, vector<1x256xf32>
    %9 = vector.broadcast %8 : vector<1x256xf32> to vector<64x256xf32>
    %10 = arith.mulf %9, %5 : vector<64x256xf32>
    %11 = arith.select %7, %5, %10 : vector<64x256xi1>, vector<64x256xf32>
    %12 = arith.truncf %11 : vector<64x256xf32> to vector<64x256xbf16>
    %c0_7 = arith.constant 0 : index
    %c0_8 = arith.constant 0 : index
    %13 = vector.load %arg4[%c0_7, %c0_8] : memref<64x256xbf16, #tpu.memory_space<vmem>>, vector<64x256xbf16>
    tpu.vector_store %arg4[%c0_7, %c0_8], %12 {strides = array<i32>} : memref<64x256xbf16, #tpu.memory_space<vmem>>, vector<64x256xbf16>,
    return
  }
  func.func @transform_0(%arg0: i32) -> (i32, i32) {
    %c0_i32 = arith.constant 0 : i32
    %c0_i32_0 = arith.constant 0 : i32
    return %arg0, %c0_i32 : i32, i32
  }
  func.func @transform_1(%arg0: i32) -> (i32, i32) {
    %c0_i32 = arith.constant 0 : i32
    %c0_i32_0 = arith.constant 0 : i32
    %c0_i32_1 = arith.constant 0 : i32
    return %c0_i32, %c0_i32_0 : i32, i32
  }
  func.func @transform_2(%arg0: i32) -> (i32, i32) {
    %c0_i32 = arith.constant 0 : i32
    %c0_i32_0 = arith.constant 0 : i32
    %c0_i32_1 = arith.constant 0 : i32
    return %c0_i32, %c0_i32_0 : i32, i32
  }
  func.func @transform_3(%arg0: i32) -> (i32, i32) {
    %c0_i32 = arith.constant 0 : i32
    %c0_i32_0 = arith.constant 0 : i32
    return %arg0, %c0_i32 : i32, i32
  }
}

</mosaic_0001>

<llo_original>
// kernel: model.2
$region0: #{model.2}
  #allocation0 [shape = 'u32[]', space=smem, size = 0x4, offset = 0x4, fixed_abs, tag = 'smem constant byte address 0x4 - core index']
  #allocation1 [shape = 'u32[144,128]{1,0:T(1,128)}', space=vmem, size = 0x12000, scoped, tag = 'internal scratch']
  %s0 = inlined_call_operand.vmem [shape: bf16[512,128], index: 0, kind: input, shape index: {}]
  %s1 = inlined_call_operand.vmem [shape: bf16[128,128], index: 1, kind: input, shape index: {}]
  %s2 = inlined_call_operand.vmem [shape: f32[2,128], index: 2, kind: input, shape index: {}]
  %s3 = inlined_call_operand.vmem [shape: bf16[512,128], index: 3, kind: output, shape index: {}]
  %s4 = sld [smem:[#allocation0]]
  $region45: #{model.2} parent=0
    _
  %s6 = ssub.s32 1, %s4
  %s7 = scalar_select 0, %s6, %s4
  loop: start=0, step=1, limit=4
  $region2: #{model.2} parent=0 // loop_pre_header
    _
  $region3: #{model.2} parent=0 // loop_header
    %s9 = sphi 0, %s13
    %p10 = scmp.ge.s32.totalorder %s9, 4
    %s19 = sphi 0, %s21
    %s22 = sphi 0, %s19
    %s23 = sphi 0, %s22
    %s39 = sphi 0, %s23
    %s43 = sphi 0, %s43
    %s45 = sphi 0, %s43
    %s46 = sphi 0, %s45
    %s60 = sphi 0, %s46
    %s64 = sphi 0, %s64
    %s66 = sphi 0, %s64
    %s67 = sphi 0, %s66
    %s81 = sphi 0, %s67
    %s87 = sphi 0, %s89
    %s90 = sphi 0, %s87
    %s91 = sphi 0, %s90
    %s107 = sphi 0, %s91
  $region4: #{model.2} parent=0 // loop_header_branch
    %12 = sbr.rel (%p10) target = $region8
  $region5: #{model.2} parent=0 // loop_body
    %s14 = ssub.s32 %s9, 1
    %s15 = ssub.s32 %s9, 2
    %s16 = sadd.s32 %s9, 1
    %s17 = ssub.s32 %s9, %s16
    %p18 = scmp.eq.s32.totalorder %s17, 0
    %s20 = sadd.s32 %s19, 1
    %s21 = scalar_select %p18, %s19, %s20
    %p24 = pneg %p18
    %p25 = scmp.eq.s32.totalorder %s9, 1
    %p26 = por %p24, %p25
    %p27 = scmp.ne.s32.totalorder %s19, %s22
    %p28 = scmp.eq.s32.totalorder %s9, 0
    %p29 = por %p27, %p28
    %p30 = scmp.ne.s32.totalorder %s19, %s22
    %p31 = scmp.eq.s32.totalorder %s14, 1
    %p32 = por %p30, %p31
    %p33 = scmp.ne.s32.totalorder %s22, %s23
    %p34 = scmp.eq.s32.totalorder %s14, 0
    %p35 = por %p33, %p34
    %p36 = scmp.ne.s32.totalorder %s22, %s23
    %p37 = scmp.eq.s32.totalorder %s15, 1
    %p38 = por %p36, %p37
    %p40 = scmp.ne.s32.totalorder %s23, %s39
    %p41 = scmp.eq.s32.totalorder %s15, 0
    %p42 = por %p40, %p41
    %s44 = sadd.s32 %s43, 1
    %p47 = scmp.eq.s32.totalorder %s9, 1
    %p48 = scmp.ne.s32.totalorder %s43, %s45
    %p49 = scmp.eq.s32.totalorder %s9, 0
    %p50 = por %p48, %p49
    %p51 = scmp.ne.s32.totalorder %s43, %s45
    %p52 = scmp.eq.s32.totalorder %s14, 1
    %p53 = por %p51, %p52
    %p54 = scmp.ne.s32.totalorder %s45, %s46
    %p55 = scmp.eq.s32.totalorder %s14, 0
    %p56 = por %p54, %p55
    %p57 = scmp.ne.s32.totalorder %s45, %s46
    %p58 = scmp.eq.s32.totalorder %s15, 1
    %p59 = por %p57, %p58
    %p61 = scmp.ne.s32.totalorder %s46, %s60
    %p62 = scmp.eq.s32.totalorder %s15, 0
    %p63 = por %p61, %p62
    %s65 = sadd.s32 %s64, 1
    %p68 = scmp.eq.s32.totalorder %s9, 1
    %p69 = scmp.ne.s32.totalorder %s64, %s66
    %p70 = scmp.eq.s32.totalorder %s9, 0
    %p71 = por %p69, %p70
    %p72 = scmp.ne.s32.totalorder %s64, %s66
    %p73 = scmp.eq.s32.totalorder %s14, 1
    %p74 = por %p72, %p73
    %p75 = scmp.ne.s32.totalorder %s66, %s67
    %p76 = scmp.eq.s32.totalorder %s14, 0
    %p77 = por %p75, %p76
    %p78 = scmp.ne.s32.totalorder %s66, %s67
    %p79 = scmp.eq.s32.totalorder %s15, 1
    %p80 = por %p78, %p79
    %p82 = scmp.ne.s32.totalorder %s67, %s81
    %p83 = scmp.eq.s32.totalorder %s15, 0
    %p84 = por %p82, %p83
    %s85 = ssub.s32 %s9, %s16
    %p86 = scmp.eq.s32.totalorder %s85, 0
    %s88 = sadd.s32 %s87, 1
    %s89 = scalar_select %p86, %s87, %s88
    %p92 = pneg %p86
    %p93 = scmp.eq.s32.totalorder %s9, 1
    %p94 = por %p92, %p93
    %p95 = scmp.ne.s32.totalorder %s87, %s90
    %p96 = scmp.eq.s32.totalorder %s9, 0
    %p97 = por %p95, %p96
    %p98 = scmp.ne.s32.totalorder %s87, %s90
    %p99 = scmp.eq.s32.totalorder %s14, 1
    %p100 = por %p98, %p99
    %p101 = scmp.ne.s32.totalorder %s90, %s91
    %p102 = scmp.eq.s32.totalorder %s14, 0
    %p103 = por %p101, %p102
    %p104 = scmp.ne.s32.totalorder %s90, %s91
    %p105 = scmp.eq.s32.totalorder %s15, 1
    %p106 = por %p104, %p105
    %p108 = scmp.ne.s32.totalorder %s91, %s107
    %p109 = scmp.eq.s32.totalorder %s15, 0
    %p110 = por %p108, %p109
    %p111 = scmp.le.s32.totalorder 1, %s9
    %p112 = scmp.lt.s32.totalorder %s9, 3
    %p113 = pnand %p111, %p112
    %p114 = pneg %p113
    // Predicated region
    $region9: #{model.2} parent=5 // pred_check
      _
    $region10: #{model.2} parent=5 // pred_check_branch
      %116 = sbr.rel (%p113) target = $region12
    $region11: #{model.2} parent=5 // pred_region
      %s117 = ssub.s32 %s9, 1
      // Predicated region
      $region13: #{model.2} parent=11 // pred_check
        %p118 = pneg %p56
      $region14: #{model.2} parent=11 // pred_check_branch
        %120 = sbr.rel (%p118) target = $region16
      $region15: #{model.2} parent=11 // pred_region
        _
      $region16: #{model.2} parent=11 // pred_fallthru
        _
      // Predicated region
      $region17: #{model.2} parent=11 // pred_check
        %p121 = pneg %p77
      $region18: #{model.2} parent=11 // pred_check_branch
        %123 = sbr.rel (%p121) target = $region20
      $region19: #{model.2} parent=11 // pred_region
        _
      $region20: #{model.2} parent=11 // pred_fallthru
        _
    $region12: #{model.2} parent=5 // pred_fallthru
      _
    %p124 = scmp.lt.s32.totalorder %s9, 2
    // Predicated region
    $region21: #{model.2} parent=5 // pred_check
      %p125 = pneg %p124
    $region22: #{model.2} parent=5 // pred_check_branch
      %127 = sbr.rel (%p125) target = $region24
    $region23: #{model.2} parent=5 // pred_region
      // Predicated region
      $region25: #{model.2} parent=23 // pred_check
        %p128 = pneg %p29
      $region26: #{model.2} parent=23 // pred_check_branch
        %130 = sbr.rel (%p128) target = $region28
      $region27: #{model.2} parent=23 // pred_region
        %s131 = smul.u32 32, %s9
        %p132 = scmp.lt.s32.totalorder %s131, 63
        %s133 = scalar_select %p132, %s131, 63
        %s134 = smul.addr %s133, 4
        %s135 = scalar_lea.vmem %s0, %s134
        %s136 = smul.u32 32, %s9
      $region28: #{model.2} parent=23 // pred_fallthru
        _
    $region24: #{model.2} parent=5 // pred_fallthru
      _
    %p137 = scmp.le.s32.totalorder 1, %s9
    %p138 = scmp.lt.s32.totalorder %s9, 3
    %p139 = pnand %p137, %p138
    %p140 = pneg %p139
    // Predicated region
    $region29: #{model.2} parent=5 // pred_check
      _
    $region30: #{model.2} parent=5 // pred_check_branch
      %142 = sbr.rel (%p139) target = $region32
    $region31: #{model.2} parent=5 // pred_region
      %s143 = ssub.s32 %s9, 1
      %s144 = smul.u32 32, %s14
      %p145 = scmp.lt.s32.totalorder %s144, 63
      %s146 = scalar_select %p145, %s144, 63
      %s147 = smul.addr %s146, 4
      %s148 = scalar_lea.vmem %s0, %s147
      %p149 = pneg %p35
      %p150 = pneg %p32
      %p151 = pneg %p56
      %p152 = pneg %p53
      %p153 = pneg %p77
      %p154 = pneg %p74
      %p155 = pneg %p103
      %p156 = pneg %p100
      %s157 = smul.u32 32, %s14
      %p158 = scmp.lt.s32.totalorder %s157, 63
      %s159 = scalar_select %p158, %s157, 63
      %s160 = smul.addr %s159, 4
      %s161 = scalar_lea.vmem %s3, %s160
      %s162 = smul.u32 32, %s14
      %p163 = scmp.lt.s32.totalorder %s162, 63
      %s164 = scalar_select %p163, %s162, 63
      %s165 = smul.addr %s164, 4
      %s166 = scalar_lea.vmem %s0, %s165
      %s167 = smul.u32 32, %s14
      %s168 = smul.u32 32, %s14
      %p169 = scmp.lt.s32.totalorder %s168, 63
      %s170 = scalar_select %p169, %s168, 63
      %s171 = smul.addr %s170, 4
      %s172 = scalar_lea.vmem %s3, %s171
      %s173 = smul.u32 32, %s14
      %v175 = vld [vmem:[%s166] sm:$0xf]
      %v176 = vld [vmem:[%s166 + $0x4] sm:$0xf]
      %v177 = vld [vmem:[%s166 + $0x8] sm:$0xf]
      %v178 = vld [vmem:[%s166 + $0xc] sm:$0xf]
      %v179 = vld [vmem:[%s166 + $0x10] sm:$0xf]
      %v180 = vld [vmem:[%s166 + $0x14] sm:$0xf]
      %v181 = vld [vmem:[%s166 + $0x18] sm:$0xf]
      %v182 = vld [vmem:[%s166 + $0x1c] sm:$0xf]
      %v183 = vld [vmem:[%s166 + $0x20] sm:$0xf]
      %v184 = vld [vmem:[%s166 + $0x24] sm:$0xf]
      %v185 = vld [vmem:[%s166 + $0x28] sm:$0xf]
      %v186 = vld [vmem:[%s166 + $0x2c] sm:$0xf]
      %v187 = vld [vmem:[%s166 + $0x30] sm:$0xf]
      %v188 = vld [vmem:[%s166 + $0x34] sm:$0xf]
      %v189 = vld [vmem:[%s166 + $0x38] sm:$0xf]
      %v190 = vld [vmem:[%s166 + $0x3c] sm:$0xf]
      %v191 = vld [vmem:[%s166 + $0x40] sm:$0xf]
      %v192 = vld [vmem:[%s166 + $0x44] sm:$0xf]
      %v193 = vld [vmem:[%s166 + $0x48] sm:$0xf]
      %v194 = vld [vmem:[%s166 + $0x4c] sm:$0xf]
      %v195 = vld [vmem:[%s166 + $0x50] sm:$0xf]
      %v196 = vld [vmem:[%s166 + $0x54] sm:$0xf]
      %v197 = vld [vmem:[%s166 + $0x58] sm:$0xf]
      %v198 = vld [vmem:[%s166 + $0x5c] sm:$0xf]
      %v199 = vld [vmem:[%s166 + $0x60] sm:$0xf]
      %v200 = vld [vmem:[%s166 + $0x64] sm:$0xf]
      %v201 = vld [vmem:[%s166 + $0x68] sm:$0xf]
      %v202 = vld [vmem:[%s166 + $0x6c] sm:$0xf]
      %v203 = vld [vmem:[%s166 + $0x70] sm:$0xf]
      %v204 = vld [vmem:[%s166 + $0x74] sm:$0xf]
      %v205 = vld [vmem:[%s166 + $0x78] sm:$0xf]
      %v206 = vld [vmem:[%s166 + $0x7c] sm:$0xf]
      %v207 = vld [vmem:[%s1] sm:$0xf]
      %v208 = vld [vmem:[%s1 + $0x4] sm:$0xf]
      %v209 = vld [vmem:[%s1 + $0x8] sm:$0xf]
      %v210 = vld [vmem:[%s1 + $0xc] sm:$0xf]
      %v211 = vld [vmem:[%s1 + $0x10] sm:$0xf]
      %v212 = vld [vmem:[%s1 + $0x14] sm:$0xf]
      %v213 = vld [vmem:[%s1 + $0x18] sm:$0xf]
      %v214 = vld [vmem:[%s1 + $0x1c] sm:$0xf]
      %v215 = vld [vmem:[%s1 + $0x20] sm:$0xf]
      %v216 = vld [vmem:[%s1 + $0x24] sm:$0xf]
      %v217 = vld [vmem:[%s1 + $0x28] sm:$0xf]
      %v218 = vld [vmem:[%s1 + $0x2c] sm:$0xf]
      %v219 = vld [vmem:[%s1 + $0x30] sm:$0xf]
      %v220 = vld [vmem:[%s1 + $0x34] sm:$0xf]
      %v221 = vld [vmem:[%s1 + $0x38] sm:$0xf]
      %v222 = vld [vmem:[%s1 + $0x3c] sm:$0xf]
      %v223 = vld [vmem:[%s2] sm:$0x1]
      %v224 = vlaneseq
      %v225 = vshrl.u32 %v224, 7
      %v226 = vsub.s32 0, %v225
      %v227 = vrot.slane %v223, %v226
      %v260 = vunpack.c.l.b16 %v175
      %v261 = vunpack.c.l.b16 %v176
      %v262 = vunpack.c.l.b16 %v177
      %v263 = vunpack.c.l.b16 %v178
      %v264 = vunpack.c.l.b16 %v179
      %v265 = vunpack.c.l.b16 %v180
      %v266 = vunpack.c.l.b16 %v181
      %v267 = vunpack.c.l.b16 %v182
      %v268 = vunpack.c.l.b16 %v183
      %v269 = vunpack.c.l.b16 %v184
      %v270 = vunpack.c.l.b16 %v185
      %v271 = vunpack.c.l.b16 %v186
      %v272 = vunpack.c.l.b16 %v187
      %v273 = vunpack.c.l.b16 %v188
      %v274 = vunpack.c.l.b16 %v189
      %v275 = vunpack.c.l.b16 %v190
      %v276 = vunpack.c.l.b16 %v191
      %v277 = vunpack.c.l.b16 %v192
      %v278 = vunpack.c.l.b16 %v193
      %v279 = vunpack.c.l.b16 %v194
      %v280 = vunpack.c.l.b16 %v195
      %v281 = vunpack.c.l.b16 %v196
      %v282 = vunpack.c.l.b16 %v197
      %v283 = vunpack.c.l.b16 %v198
      %v284 = vunpack.c.l.b16 %v199
      %v285 = vunpack.c.l.b16 %v200
      %v286 = vunpack.c.l.b16 %v201
      %v287 = vunpack.c.l.b16 %v202
      %v288 = vunpack.c.l.b16 %v203
      %v289 = vunpack.c.l.b16 %v204
      %v290 = vunpack.c.l.b16 %v205
      %v291 = vunpack.c.l.b16 %v206
      %v292 = vpack.c.b16 %v261, %v260
      %v293 = vpack.c.b16 %v263, %v262
      %v294 = vpack.c.b16 %v265, %v264
      %v295 = vpack.c.b16 %v267, %v266
      %v296 = vpack.c.b16 %v269, %v268
      %v297 = vpack.c.b16 %v271, %v270
      %v298 = vpack.c.b16 %v273, %v272
      %v299 = vpack.c.b16 %v275, %v274
      %v300 = vpack.c.b16 %v277, %v276
      %v301 = vpack.c.b16 %v279, %v278
      %v302 = vpack.c.b16 %v281, %v280
      %v303 = vpack.c.b16 %v283, %v282
      %v304 = vpack.c.b16 %v285, %v284
      %v305 = vpack.c.b16 %v287, %v286
      %v306 = vpack.c.b16 %v289, %v288
      %v307 = vpack.c.b16 %v291, %v290
      %v340 = vunpack.c.l.b16 %v207
      %v341 = vunpack.c.l.b16 %v208
      %v342 = vunpack.c.l.b16 %v209
      %v343 = vunpack.c.l.b16 %v210
      %v344 = vunpack.c.l.b16 %v211
      %v345 = vunpack.c.l.b16 %v212
      %v346 = vunpack.c.l.b16 %v213
      %v347 = vunpack.c.l.b16 %v214
      %v348 = vunpack.c.l.b16 %v215
      %v349 = vunpack.c.l.b16 %v216
      %v350 = vunpack.c.l.b16 %v217
      %v351 = vunpack.c.l.b16 %v218
      %v352 = vunpack.c.l.b16 %v219
      %v353 = vunpack.c.l.b16 %v220
      %v354 = vunpack.c.l.b16 %v221
      %v355 = vunpack.c.l.b16 %v222
      %v356 = vpack.c.b16 %v341, %v340
      %v357 = vpack.c.b16 %v343, %v342
      %v358 = vpack.c.b16 %v345, %v344
      %v359 = vpack.c.b16 %v347, %v346
      %v360 = vpack.c.b16 %v349, %v348
      %v361 = vpack.c.b16 %v351, %v350
      %v362 = vpack.c.b16 %v353, %v352
      %v363 = vpack.c.b16 %v355, %v354
      %372 = vmatprep.subr.bf16.mxu0 0
      %373 = vmatpush1.bf16.msra.mxu0 %v356
      %374 = vmatprep.subr.bf16.mxu0 0
      %375 = vmatpush1.bf16.msra.mxu0 %v357
      %376 = vmatprep.subr.bf16.mxu0 0
      %377 = vmatpush1.bf16.msra.mxu0 %v358
      %378 = vmatprep.subr.bf16.mxu0 0
      %379 = vmatpush1.bf16.msra.mxu0 %v359
      %380 = vmatprep.subr.bf16.mxu0 0
      %381 = vmatpush1.bf16.msra.mxu0 %v360
      %382 = vmatprep.subr.bf16.mxu0 0
      %383 = vmatpush1.bf16.msra.mxu0 %v361
      %384 = vmatprep.subr.bf16.mxu0 0
      %385 = vmatpush1.bf16.msra.mxu0 %v362
      %386 = vmatprep.subr.bf16.mxu0 0
      %387 = vmatpush1.bf16.msra.mxu0 %v363
      %388 = vmatprep.subr.bf16.mxu0 0
      %389 = vmatpush1.bf16.msra.mxu0 0
      %390 = vmatprep.subr.bf16.mxu0 0
      %391 = vmatpush1.bf16.msra.mxu0 0
      %392 = vmatprep.subr.bf16.mxu0 0
      %393 = vmatpush1.bf16.msra.mxu0 0
      %394 = vmatprep.subr.bf16.mxu0 0
      %395 = vmatpush1.bf16.msra.mxu0 0
      %396 = vmatprep.subr.bf16.mxu0 0
      %397 = vmatpush1.bf16.msra.mxu0 0
      %398 = vmatprep.subr.bf16.mxu0 0
      %399 = vmatpush1.bf16.msra.mxu0 0
      %400 = vmatprep.subr.bf16.mxu0 0
      %401 = vmatpush1.bf16.msra.mxu0 0
      %402 = vmatprep.subr.bf16.mxu0 0
      %403 = vmatpush1.bf16.msra.mxu0 0
      %404 = vmatprep.mubr.bf16.mxu0 0
      %405 = vmatmul.mubr.bf16.gmra.mrb[0].mxu0 %v292
      %v406 = vpop.f32.mrb[0].mxu0
      %v407 = vadd.f32 %v227, %v406
      %v408 = vpop.f32.mrb[0].mxu0
      %v409 = vpop.f32.mrb[0].mxu0
      %v410 = vadd.f32 %v227, %v409
      %v411 = vpop.f32.mrb[0].mxu0
      %412 = vmatprep.mubr.bf16.mxu0 0
      %413 = vmatmul.mubr.bf16.gmra.mrb[0].mxu0 %v293
      %v414 = vpop.f32.mrb[0].mxu0
      %v415 = vadd.f32 %v227, %v414
      %v416 = vpop.f32.mrb[0].mxu0
      %v417 = vpop.f32.mrb[0].mxu0
      %v418 = vadd.f32 %v227, %v417
      %v419 = vpop.f32.mrb[0].mxu0
      %420 = vmatprep.mubr.bf16.mxu0 0
      %421 = vmatmul.mubr.bf16.gmra.mrb[0].mxu0 %v294
      %v422 = vpop.f32.mrb[0].mxu0
      %v423 = vadd.f32 %v227, %v422
      %v424 = vpop.f32.mrb[0].mxu0
      %v425 = vpop.f32.mrb[0].mxu0
      %v426 = vadd.f32 %v227, %v425
      %v427 = vpop.f32.mrb[0].mxu0
      %428 = vmatprep.mubr.bf16.mxu0 0
      %429 = vmatmul.mubr.bf16.gmra.mrb[0].mxu0 %v295
      %v430 = vpop.f32.mrb[0].mxu0
      %v431 = vadd.f32 %v227, %v430
      %v432 = vpop.f32.mrb[0].mxu0
      %v433 = vpop.f32.mrb[0].mxu0
      %v434 = vadd.f32 %v227, %v433
      %v435 = vpop.f32.mrb[0].mxu0
      %436 = vmatprep.mubr.bf16.mxu0 0
      %437 = vmatmul.mubr.bf16.gmra.mrb[0].mxu0 %v296
      %v438 = vpop.f32.mrb[0].mxu0
      %v439 = vadd.f32 %v227, %v438
      %v440 = vpop.f32.mrb[0].mxu0
      %v441 = vpop.f32.mrb[0].mxu0
      %v442 = vadd.f32 %v227, %v441
      %v443 = vpop.f32.mrb[0].mxu0
      %444 = vmatprep.mubr.bf16.mxu0 0
      %445 = vmatmul.mubr.bf16.gmra.mrb[0].mxu0 %v297
      %v446 = vpop.f32.mrb[0].mxu0
      %v447 = vadd.f32 %v227, %v446
      %v448 = vpop.f32.mrb[0].mxu0
      %v449 = vpop.f32.mrb[0].mxu0
      %v450 = vadd.f32 %v227, %v449
      %v451 = vpop.f32.mrb[0].mxu0
      %452 = vmatprep.mubr.bf16.mxu0 0
      %453 = vmatmul.mubr.bf16.gmra.mrb[0].mxu0 %v298
      %v454 = vpop.f32.mrb[0].mxu0
      %v455 = vadd.f32 %v227, %v454
      %v456 = vpop.f32.mrb[0].mxu0
      %v457 = vpop.f32.mrb[0].mxu0
      %v458 = vadd.f32 %v227, %v457
      %v459 = vpop.f32.mrb[0].mxu0
      %460 = vmatprep.mubr.bf16.mxu0 0
      %461 = vmatmul.mubr.bf16.gmra.mrb[0].mxu0 %v299
      %v462 = vpop.f32.mrb[0].mxu0
      %v463 = vadd.f32 %v227, %v462
      %v464 = vpop.f32.mrb[0].mxu0
      %v465 = vpop.f32.mrb[0].mxu0
      %v466 = vadd.f32 %v227, %v465
      %v467 = vpop.f32.mrb[0].mxu0
      %468 = vmatprep.mubr.bf16.mxu0 0
      %469 = vmatmul.mubr.bf16.gmra.mrb[0].mxu0 %v300
      %v470 = vpop.f32.mrb[0].mxu0
      %v471 = vadd.f32 %v227, %v470
      %v472 = vpop.f32.mrb[0].mxu0
      %v473 = vpop.f32.mrb[0].mxu0
      %v474 = vadd.f32 %v227, %v473
      %v475 = vpop.f32.mrb[0].mxu0
      %476 = vmatprep.mubr.bf16.mxu0 0
      %477 = vmatmul.mubr.bf16.gmra.mrb[0].mxu0 %v301
      %v478 = vpop.f32.mrb[0].mxu0
      %v479 = vadd.f32 %v227, %v478
      %v480 = vpop.f32.mrb[0].mxu0
      %v481 = vpop.f32.mrb[0].mxu0
      %v482 = vadd.f32 %v227, %v481
      %v483 = vpop.f32.mrb[0].mxu0
      %484 = vmatprep.mubr.bf16.mxu0 0
      %485 = vmatmul.mubr.bf16.gmra.mrb[0].mxu0 %v302
      %v486 = vpop.f32.mrb[0].mxu0
      %v487 = vadd.f32 %v227, %v486
      %v488 = vpop.f32.mrb[0].mxu0
      %v489 = vpop.f32.mrb[0].mxu0
      %v490 = vadd.f32 %v227, %v489
      %v491 = vpop.f32.mrb[0].mxu0
      %492 = vmatprep.mubr.bf16.mxu0 0
      %493 = vmatmul.mubr.bf16.gmra.mrb[0].mxu0 %v303
      %v494 = vpop.f32.mrb[0].mxu0
      %v495 = vadd.f32 %v227, %v494
      %v496 = vpop.f32.mrb[0].mxu0
      %v497 = vpop.f32.mrb[0].mxu0
      %v498 = vadd.f32 %v227, %v497
      %v499 = vpop.f32.mrb[0].mxu0
      %500 = vmatprep.mubr.bf16.mxu0 0
      %501 = vmatmul.mubr.bf16.gmra.mrb[0].mxu0 %v304
      %v502 = vpop.f32.mrb[0].mxu0
      %v503 = vadd.f32 %v227, %v502
      %v504 = vpop.f32.mrb[0].mxu0
      %v505 = vpop.f32.mrb[0].mxu0
      %v506 = vadd.f32 %v227, %v505
      %v507 = vpop.f32.mrb[0].mxu0
      %508 = vmatprep.mubr.bf16.mxu0 0
      %509 = vmatmul.mubr.bf16.gmra.mrb[0].mxu0 %v305
      %v510 = vpop.f32.mrb[0].mxu0
      %v511 = vadd.f32 %v227, %v510
      %v512 = vpop.f32.mrb[0].mxu0
      %v513 = vpop.f32.mrb[0].mxu0
      %v514 = vadd.f32 %v227, %v513
      %v515 = vpop.f32.mrb[0].mxu0
      %516 = vmatprep.mubr.bf16.mxu0 0
      %517 = vmatmul.mubr.bf16.gmra.mrb[0].mxu0 %v306
      %v518 = vpop.f32.mrb[0].mxu0
      %v519 = vadd.f32 %v227, %v518
      %v520 = vpop.f32.mrb[0].mxu0
      %v521 = vpop.f32.mrb[0].mxu0
      %v522 = vadd.f32 %v227, %v521
      %v523 = vpop.f32.mrb[0].mxu0
      %524 = vmatprep.mubr.bf16.mxu0 0
      %525 = vmatmul.mubr.bf16.gmra.mrb[0].mxu0 %v307
      %v526 = vpop.f32.mrb[0].mxu0
      %v527 = vadd.f32 %v227, %v526
      %v528 = vpop.f32.mrb[0].mxu0
      %v529 = vpop.f32.mrb[0].mxu0
      %v530 = vadd.f32 %v227, %v529
      %v531 = vpop.f32.mrb[0].mxu0
      %532 = vdwg.mxu0
      %vm533 = vcmp.gt.f32.partialorder %v407, 0.0
      %vm534 = vcmp.gt.f32.partialorder %v410, 0.0
      %vm535 = vcmp.gt.f32.partialorder %v415, 0.0
      %vm536 = vcmp.gt.f32.partialorder %v418, 0.0
      %vm537 = vcmp.gt.f32.partialorder %v423, 0.0
      %vm538 = vcmp.gt.f32.partialorder %v426, 0.0
      %vm539 = vcmp.gt.f32.partialorder %v431, 0.0
      %vm540 = vcmp.gt.f32.partialorder %v434, 0.0
      %vm541 = vcmp.gt.f32.partialorder %v439, 0.0
      %vm542 = vcmp.gt.f32.partialorder %v442, 0.0
      %vm543 = vcmp.gt.f32.partialorder %v447, 0.0
      %vm544 = vcmp.gt.f32.partialorder %v450, 0.0
      %vm545 = vcmp.gt.f32.partialorder %v455, 0.0
      %vm546 = vcmp.gt.f32.partialorder %v458, 0.0
      %vm547 = vcmp.gt.f32.partialorder %v463, 0.0
      %vm548 = vcmp.gt.f32.partialorder %v466, 0.0
      %vm549 = vcmp.gt.f32.partialorder %v471, 0.0
      %vm550 = vcmp.gt.f32.partialorder %v474, 0.0
      %vm551 = vcmp.gt.f32.partialorder %v479, 0.0
      %vm552 = vcmp.gt.f32.partialorder %v482, 0.0
      %vm553 = vcmp.gt.f32.partialorder %v487, 0.0
      %vm554 = vcmp.gt.f32.partialorder %v490, 0.0
      %vm555 = vcmp.gt.f32.partialorder %v495, 0.0
      %vm556 = vcmp.gt.f32.partialorder %v498, 0.0
      %vm557 = vcmp.gt.f32.partialorder %v503, 0.0
      %vm558 = vcmp.gt.f32.partialorder %v506, 0.0
      %vm559 = vcmp.gt.f32.partialorder %v511, 0.0
      %vm560 = vcmp.gt.f32.partialorder %v514, 0.0
      %vm561 = vcmp.gt.f32.partialorder %v519, 0.0
      %vm562 = vcmp.gt.f32.partialorder %v522, 0.0
      %vm563 = vcmp.gt.f32.partialorder %v527, 0.0
      %vm564 = vcmp.gt.f32.partialorder %v530, 0.0
      %v565 = vld [vmem:[%s2 + $0x1] sm:$0x1]
      %v566 = vlaneseq
      %v567 = vshrl.u32 %v566, 7
      %v568 = vsub.s32 0, %v567
      %v569 = vrot.slane %v565, %v568
      %v570 = vmul.f32 %v569, %v407
      %v571 = vmul.f32 %v569, %v410
      %v572 = vmul.f32 %v569, %v415
      %v573 = vmul.f32 %v569, %v418
      %v574 = vmul.f32 %v569, %v423
      %v575 = vmul.f32 %v569, %v426
      %v576 = vmul.f32 %v569, %v431
      %v577 = vmul.f32 %v569, %v434
      %v578 = vmul.f32 %v569, %v439
      %v579 = vmul.f32 %v569, %v442
      %v580 = vmul.f32 %v569, %v447
      %v581 = vmul.f32 %v569, %v450
      %v582 = vmul.f32 %v569, %v455
      %v583 = vmul.f32 %v569, %v458
      %v584 = vmul.f32 %v569, %v463
      %v585 = vmul.f32 %v569, %v466
      %v586 = vmul.f32 %v569, %v471
      %v587 = vmul.f32 %v569, %v474
      %v588 = vmul.f32 %v569, %v479
      %v589 = vmul.f32 %v569, %v482
      %v590 = vmul.f32 %v569, %v487
      %v591 = vmul.f32 %v569, %v490
      %v592 = vmul.f32 %v569, %v495
      %v593 = vmul.f32 %v569, %v498
      %v594 = vmul.f32 %v569, %v503
      %v595 = vmul.f32 %v569, %v506
      %v596 = vmul.f32 %v569, %v511
      %v597 = vmul.f32 %v569, %v514
      %v598 = vmul.f32 %v569, %v519
      %v599 = vmul.f32 %v569, %v522
      %v600 = vmul.f32 %v569, %v527
      %v601 = vmul.f32 %v569, %v530
      %v602 = vsel %vm533, %v407, %v570
      %v603 = vsel %vm534, %v410, %v571
      %v604 = vsel %vm535, %v415, %v572
      %v605 = vsel %vm536, %v418, %v573
      %v606 = vsel %vm537, %v423, %v574
      %v607 = vsel %vm538, %v426, %v575
      %v608 = vsel %vm539, %v431, %v576
      %v609 = vsel %vm540, %v434, %v577
      %v610 = vsel %vm541, %v439, %v578
      %v611 = vsel %vm542, %v442, %v579
      %v612 = vsel %vm543, %v447, %v580
      %v613 = vsel %vm544, %v450, %v581
      %v614 = vsel %vm545, %v455, %v582
      %v615 = vsel %vm546, %v458, %v583
      %v616 = vsel %vm547, %v463, %v584
      %v617 = vsel %vm548, %v466, %v585
      %v618 = vsel %vm549, %v471, %v586
      %v619 = vsel %vm550, %v474, %v587
      %v620 = vsel %vm551, %v479, %v588
      %v621 = vsel %vm552, %v482, %v589
      %v622 = vsel %vm553, %v487, %v590
      %v623 = vsel %vm554, %v490, %v591
      %v624 = vsel %vm555, %v495, %v592
      %v625 = vsel %vm556, %v498, %v593
      %v626 = vsel %vm557, %v503, %v594
      %v627 = vsel %vm558, %v506, %v595
      %v628 = vsel %vm559, %v511, %v596
      %v629 = vsel %vm560, %v514, %v597
      %v630 = vsel %vm561, %v519, %v598
      %v631 = vsel %vm562, %v522, %v599
      %v632 = vsel %vm563, %v527, %v600
      %v633 = vsel %vm564, %v530, %v601
      %v634 = vpack.c.bf16 %v603, %v602
      %v635 = vpack.c.bf16 %v605, %v604
      %v636 = vpack.c.bf16 %v607, %v606
      %v637 = vpack.c.bf16 %v609, %v608
      %v638 = vpack.c.bf16 %v611, %v610
      %v639 = vpack.c.bf16 %v613, %v612
      %v640 = vpack.c.bf16 %v615, %v614
      %v641 = vpack.c.bf16 %v617, %v616
      %v642 = vpack.c.bf16 %v619, %v618
      %v643 = vpack.c.bf16 %v621, %v620
      %v644 = vpack.c.bf16 %v623, %v622
      %v645 = vpack.c.bf16 %v625, %v624
      %v646 = vpack.c.bf16 %v627, %v626
      %v647 = vpack.c.bf16 %v629, %v628
      %v648 = vpack.c.bf16 %v631, %v630
      %v649 = vpack.c.bf16 %v633, %v632
      %v666 = vunpack.c.l.b16 %v634
      %v667 = vunpack.c.h.b16 %v634
      %v668 = vunpack.c.l.b16 %v635
      %v669 = vunpack.c.h.b16 %v635
      %v670 = vunpack.c.l.b16 %v636
      %v671 = vunpack.c.h.b16 %v636
      %v672 = vunpack.c.l.b16 %v637
      %v673 = vunpack.c.h.b16 %v637
      %v674 = vunpack.c.l.b16 %v638
      %v675 = vunpack.c.h.b16 %v638
      %v676 = vunpack.c.l.b16 %v639
      %v677 = vunpack.c.h.b16 %v639
      %v678 = vunpack.c.l.b16 %v640
      %v679 = vunpack.c.h.b16 %v640
      %v680 = vunpack.c.l.b16 %v641
      %v681 = vunpack.c.h.b16 %v641
      %v682 = vunpack.c.l.b16 %v642
      %v683 = vunpack.c.h.b16 %v642
      %v684 = vunpack.c.l.b16 %v643
      %v685 = vunpack.c.h.b16 %v643
      %v686 = vunpack.c.l.b16 %v644
      %v687 = vunpack.c.h.b16 %v644
      %v688 = vunpack.c.l.b16 %v645
      %v689 = vunpack.c.h.b16 %v645
      %v690 = vunpack.c.l.b16 %v646
      %v691 = vunpack.c.h.b16 %v646
      %v692 = vunpack.c.l.b16 %v647
      %v693 = vunpack.c.h.b16 %v647
      %v694 = vunpack.c.l.b16 %v648
      %v695 = vunpack.c.h.b16 %v648
      %v696 = vunpack.c.l.b16 %v649
      %v697 = vunpack.c.h.b16 %v649
      %v698 = vpack.c.b16 %v666, %v666
      %v699 = vpack.c.b16 %v667, %v667
      %v700 = vpack.c.b16 %v668, %v668
      %v701 = vpack.c.b16 %v669, %v669
      %v702 = vpack.c.b16 %v670, %v670
      %v703 = vpack.c.b16 %v671, %v671
      %v704 = vpack.c.b16 %v672, %v672
      %v705 = vpack.c.b16 %v673, %v673
      %v706 = vpack.c.b16 %v674, %v674
      %v707 = vpack.c.b16 %v675, %v675
      %v708 = vpack.c.b16 %v676, %v676
      %v709 = vpack.c.b16 %v677, %v677
      %v710 = vpack.c.b16 %v678, %v678
      %v711 = vpack.c.b16 %v679, %v679
      %v712 = vpack.c.b16 %v680, %v680
      %v713 = vpack.c.b16 %v681, %v681
      %v714 = vpack.c.b16 %v682, %v682
      %v715 = vpack.c.b16 %v683, %v683
      %v716 = vpack.c.b16 %v684, %v684
      %v717 = vpack.c.b16 %v685, %v685
      %v718 = vpack.c.b16 %v686, %v686
      %v719 = vpack.c.b16 %v687, %v687
      %v720 = vpack.c.b16 %v688, %v688
      %v721 = vpack.c.b16 %v689, %v689
      %v722 = vpack.c.b16 %v690, %v690
      %v723 = vpack.c.b16 %v691, %v691
      %v724 = vpack.c.b16 %v692, %v692
      %v725 = vpack.c.b16 %v693, %v693
      %v726 = vpack.c.b16 %v694, %v694
      %v727 = vpack.c.b16 %v695, %v695
      %v728 = vpack.c.b16 %v696, %v696
      %v729 = vpack.c.b16 %v697, %v697
      %762 = vst [vmem:[%s172] sm:$0xf] %v698
      %763 = vst [vmem:[%s172 + $0x4] sm:$0xf] %v699
      %764 = vst [vmem:[%s172 + $0x8] sm:$0xf] %v700
      %765 = vst [vmem:[%s172 + $0xc] sm:$0xf] %v701
      %766 = vst [vmem:[%s172 + $0x10] sm:$0xf] %v702
      %767 = vst [vmem:[%s172 + $0x14] sm:$0xf] %v703
      %768 = vst [vmem:[%s172 + $0x18] sm:$0xf] %v704
      %769 = vst [vmem:[%s172 + $0x1c] sm:$0xf] %v705
      %770 = vst [vmem:[%s172 + $0x20] sm:$0xf] %v706
      %771 = vst [vmem:[%s172 + $0x24] sm:$0xf] %v707
      %772 = vst [vmem:[%s172 + $0x28] sm:$0xf] %v708
      %773 = vst [vmem:[%s172 + $0x2c] sm:$0xf] %v709
      %774 = vst [vmem:[%s172 + $0x30] sm:$0xf] %v710
      %775 = vst [vmem:[%s172 + $0x34] sm:$0xf] %v711
      %776 = vst [vmem:[%s172 + $0x38] sm:$0xf] %v712
      %777 = vst [vmem:[%s172 + $0x3c] sm:$0xf] %v713
      %778 = vst [vmem:[%s172 + $0x40] sm:$0xf] %v714
      %779 = vst [vmem:[%s172 + $0x44] sm:$0xf] %v715
      %780 = vst [vmem:[%s172 + $0x48] sm:$0xf] %v716
      %781 = vst [vmem:[%s172 + $0x4c] sm:$0xf] %v717
      %782 = vst [vmem:[%s172 + $0x50] sm:$0xf] %v718
      %783 = vst [vmem:[%s172 + $0x54] sm:$0xf] %v719
      %784 = vst [vmem:[%s172 + $0x58] sm:$0xf] %v720
      %785 = vst [vmem:[%s172 + $0x5c] sm:$0xf] %v721
      %786 = vst [vmem:[%s172 + $0x60] sm:$0xf] %v722
      %787 = vst [vmem:[%s172 + $0x64] sm:$0xf] %v723
      %788 = vst [vmem:[%s172 + $0x68] sm:$0xf] %v724
      %789 = vst [vmem:[%s172 + $0x6c] sm:$0xf] %v725
      %790 = vst [vmem:[%s172 + $0x70] sm:$0xf] %v726
      %791 = vst [vmem:[%s172 + $0x74] sm:$0xf] %v727
      %792 = vst [vmem:[%s172 + $0x78] sm:$0xf] %v728
      %793 = vst [vmem:[%s172 + $0x7c] sm:$0xf] %v729
      %s794 = smul.u32 32, %s14
      %p795 = scmp.lt.s32.totalorder %s794, 63
      %s796 = scalar_select %p795, %s794, 63
      %s797 = smul.addr %s796, 4
      %s798 = scalar_lea.vmem %s3, %s797
      // Predicated region
      $region33: #{model.2} parent=31 // pred_check
        %p799 = pneg %p100
      $region34: #{model.2} parent=31 // pred_check_branch
        %801 = sbr.rel (%p799) target = $region36
      $region35: #{model.2} parent=31 // pred_region
        %s802 = smul.u32 32, %s14
      $region36: #{model.2} parent=31 // pred_fallthru
        _
    $region32: #{model.2} parent=5 // pred_fallthru
      _
    %p803 = scmp.le.s32.totalorder 2, %s9
    // Predicated region
    $region37: #{model.2} parent=5 // pred_check
      %p804 = pneg %p803
    $region38: #{model.2} parent=5 // pred_check_branch
      %806 = sbr.rel (%p804) target = $region40
    $region39: #{model.2} parent=5 // pred_region
      %s807 = ssub.s32 %s9, 2
      // Predicated region
      $region41: #{model.2} parent=39 // pred_check
        %p808 = pneg %p106
      $region42: #{model.2} parent=39 // pred_check_branch
        %810 = sbr.rel (%p808) target = $region44
      $region43: #{model.2} parent=39 // pred_region
        %s811 = smul.u32 32, %s15
        %p812 = scmp.lt.s32.totalorder %s811, 63
        %s813 = scalar_select %p812, %s811, 63
        %s814 = smul.addr %s813, 4
        %s815 = scalar_lea.vmem %s3, %s814
      $region44: #{model.2} parent=39 // pred_fallthru
        _
    $region40: #{model.2} parent=5 // pred_fallthru
      _
  $region6: #{model.2} parent=0 // loop_footer
    %s13 = sadd.s32 1, %s9
  $region7: #{model.2} parent=0 // loop_footer_branch
    %8 = sbr.rel target = $region3
  $region8: #{model.2} parent=0 // loop_exit
    _

// kernel: model.3
$region0: #{model.3}
  #allocation0 [shape = 'u32[]', space=smem, size = 0x4, offset = 0x4, fixed_abs, tag = 'smem constant byte address 0x4 - core index']
  #allocation1 [shape = 'u32[144,128]{1,0:T(1,128)}', space=vmem, size = 0x12000, scoped, tag = 'internal scratch']
  %s0 = inlined_call_operand.vmem [shape: bf16[128,384], index: 0, kind: input, shape index: {}]
  %s1 = inlined_call_operand.vmem [shape: bf16[384,256], index: 1, kind: input, shape index: {}]
  %s2 = inlined_call_operand.vmem [shape: f32[2,256], index: 2, kind: input, shape index: {}]
  %s3 = inlined_call_operand.hbm [shape: bf16[128,256], index: 3, kind: output, shape index: {}]
  %s4 = sld [smem:[#allocation0]]
  $region45: #{model.3} parent=0
    _
  %s6 = ssub.s32 1, %s4
  %s7 = scalar_select 0, %s6, %s4
  $region1: #{model.3} parent=0
    #allocation2 [shape = 'u8[65536]{0}', space=vmem, size = 0x10000, scoped, tag = 'output window, operand 0']
    #allocation3 [shape = 's32[2]{0}', space=sflag, size = 0x8, scoped, tag = 'scoped memory for model.3']
    %8 = vsyncpa [#allocation3], 0
    %s9 = scalar_lea.sflag [#allocation3], 1
    %10 = vsyncpa %s9, 0
    loop: start=0, step=1, limit=4
    $region2: #{model.3} parent=1 // loop_pre_header
      _
    $region3: #{model.3} parent=1 // loop_header
      %s12 = sphi 0, %s16
      %p13 = scmp.ge.s32.totalorder %s12, 4
      %s22 = sphi 0, %s24
      %s25 = sphi 0, %s22
      %s26 = sphi 0, %s25
      %s42 = sphi 0, %s26
      %s46 = sphi 0, %s46
      %s48 = sphi 0, %s46
      %s49 = sphi 0, %s48
      %s63 = sphi 0, %s49
      %s67 = sphi 0, %s67
      %s69 = sphi 0, %s67
      %s70 = sphi 0, %s69
      %s84 = sphi 0, %s70
      %s90 = sphi 0, %s92
      %s93 = sphi 0, %s90
      %s94 = sphi 0, %s93
      %s110 = sphi 0, %s94
    $region4: #{model.3} parent=1 // loop_header_branch
      %15 = sbr.rel (%p13) target = $region8
    $region5: #{model.3} parent=1 // loop_body
      %s17 = ssub.s32 %s12, 1
      %s18 = ssub.s32 %s12, 2
      %s19 = sadd.s32 %s12, 1
      %s20 = ssub.s32 %s12, %s19
      %p21 = scmp.eq.s32.totalorder %s20, 0
      %s23 = sadd.s32 %s22, 1
      %s24 = scalar_select %p21, %s22, %s23
      %p27 = pneg %p21
      %p28 = scmp.eq.s32.totalorder %s12, 1
      %p29 = por %p27, %p28
      %p30 = scmp.ne.s32.totalorder %s22, %s25
      %p31 = scmp.eq.s32.totalorder %s12, 0
      %p32 = por %p30, %p31
      %p33 = scmp.ne.s32.totalorder %s22, %s25
      %p34 = scmp.eq.s32.totalorder %s17, 1
      %p35 = por %p33, %p34
      %p36 = scmp.ne.s32.totalorder %s25, %s26
      %p37 = scmp.eq.s32.totalorder %s17, 0
      %p38 = por %p36, %p37
      %p39 = scmp.ne.s32.totalorder %s25, %s26
      %p40 = scmp.eq.s32.totalorder %s18, 1
      %p41 = por %p39, %p40
      %p43 = scmp.ne.s32.totalorder %s26, %s42
      %p44 = scmp.eq.s32.totalorder %s18, 0
      %p45 = por %p43, %p44
      %s47 = sadd.s32 %s46, 1
      %p50 = scmp.eq.s32.totalorder %s12, 1
      %p51 = scmp.ne.s32.totalorder %s46, %s48
      %p52 = scmp.eq.s32.totalorder %s12, 0
      %p53 = por %p51, %p52
      %p54 = scmp.ne.s32.totalorder %s46, %s48
      %p55 = scmp.eq.s32.totalorder %s17, 1
      %p56 = por %p54, %p55
      %p57 = scmp.ne.s32.totalorder %s48, %s49
      %p58 = scmp.eq.s32.totalorder %s17, 0
      %p59 = por %p57, %p58
      %p60 = scmp.ne.s32.totalorder %s48, %s49
      %p61 = scmp.eq.s32.totalorder %s18, 1
      %p62 = por %p60, %p61
      %p64 = scmp.ne.s32.totalorder %s49, %s63
      %p65 = scmp.eq.s32.totalorder %s18, 0
      %p66 = por %p64, %p65
      %s68 = sadd.s32 %s67, 1
      %p71 = scmp.eq.s32.totalorder %s12, 1
      %p72 = scmp.ne.s32.totalorder %s67, %s69
      %p73 = scmp.eq.s32.totalorder %s12, 0
      %p74 = por %p72, %p73
      %p75 = scmp.ne.s32.totalorder %s67, %s69
      %p76 = scmp.eq.s32.totalorder %s17, 1
      %p77 = por %p75, %p76
      %p78 = scmp.ne.s32.totalorder %s69, %s70
      %p79 = scmp.eq.s32.totalorder %s17, 0
      %p80 = por %p78, %p79
      %p81 = scmp.ne.s32.totalorder %s69, %s70
      %p82 = scmp.eq.s32.totalorder %s18, 1
      %p83 = por %p81, %p82
      %p85 = scmp.ne.s32.totalorder %s70, %s84
      %p86 = scmp.eq.s32.totalorder %s18, 0
      %p87 = por %p85, %p86
      %s88 = ssub.s32 %s12, %s19
      %p89 = scmp.eq.s32.totalorder %s88, 0
      %s91 = sadd.s32 %s90, 1
      %s92 = scalar_select %p89, %s90, %s91
      %p95 = pneg %p89
      %p96 = scmp.eq.s32.totalorder %s12, 1
      %p97 = por %p95, %p96
      %p98 = scmp.ne.s32.totalorder %s90, %s93
      %p99 = scmp.eq.s32.totalorder %s12, 0
      %p100 = por %p98, %p99
      %p101 = scmp.ne.s32.totalorder %s90, %s93
      %p102 = scmp.eq.s32.totalorder %s17, 1
      %p103 = por %p101, %p102
      %p104 = scmp.ne.s32.totalorder %s93, %s94
      %p105 = scmp.eq.s32.totalorder %s17, 0
      %p106 = por %p104, %p105
      %p107 = scmp.ne.s32.totalorder %s93, %s94
      %p108 = scmp.eq.s32.totalorder %s18, 1
      %p109 = por %p107, %p108
      %p111 = scmp.ne.s32.totalorder %s94, %s110
      %p112 = scmp.eq.s32.totalorder %s18, 0
      %p113 = por %p111, %p112
      %p114 = scmp.le.s32.totalorder 1, %s12
      %p115 = scmp.lt.s32.totalorder %s12, 3
      %p116 = pnand %p114, %p115
      %p117 = pneg %p116
      // Predicated region
      $region9: #{model.3} parent=5 // pred_check
        _
      $region10: #{model.3} parent=5 // pred_check_branch
        %119 = sbr.rel (%p116) target = $region12
      $region11: #{model.3} parent=5 // pred_region
        %s120 = ssub.s32 %s12, 1
        // Predicated region
        $region13: #{model.3} parent=11 // pred_check
          %p121 = pneg %p59
        $region14: #{model.3} parent=11 // pred_check_branch
          %123 = sbr.rel (%p121) target = $region16
        $region15: #{model.3} parent=11 // pred_region
          _
        $region16: #{model.3} parent=11 // pred_fallthru
          _
        // Predicated region
        $region17: #{model.3} parent=11 // pred_check
          %p124 = pneg %p80
        $region18: #{model.3} parent=11 // pred_check_branch
          %126 = sbr.rel (%p124) target = $region20
        $region19: #{model.3} parent=11 // pred_region
          _
        $region20: #{model.3} parent=11 // pred_fallthru
          _
      $region12: #{model.3} parent=5 // pred_fallthru
        _
      %p127 = scmp.lt.s32.totalorder %s12, 2
      // Predicated region
      $region21: #{model.3} parent=5 // pred_check
        %p128 = pneg %p127
      $region22: #{model.3} parent=5 // pred_check_branch
        %130 = sbr.rel (%p128) target = $region24
      $region23: #{model.3} parent=5 // pred_region
        // Predicated region
        $region25: #{model.3} parent=23 // pred_check
          %p131 = pneg %p32
        $region26: #{model.3} parent=23 // pred_check_branch
          %133 = sbr.rel (%p131) target = $region28
        $region27: #{model.3} parent=23 // pred_region
          %s134 = smul.u32 8, %s12
          %p135 = scmp.lt.s32.totalorder %s134, 15
          %s136 = scalar_select %p135, %s134, 15
          %s137 = smul.addr %s136, 3
          %s138 = smul.addr %s137, 4
          %s139 = scalar_lea.vmem %s0, %s138
          %s140 = smul.u32 8, %s12
        $region28: #{model.3} parent=23 // pred_fallthru
          _
      $region24: #{model.3} parent=5 // pred_fallthru
        _
      %p141 = scmp.le.s32.totalorder 1, %s12
      %p142 = scmp.lt.s32.totalorder %s12, 3
      %p143 = pnand %p141, %p142
      %p144 = pneg %p143
      // Predicated region
      $region29: #{model.3} parent=5 // pred_check
        _
      $region30: #{model.3} parent=5 // pred_check_branch
        %146 = sbr.rel (%p143) target = $region32
      $region31: #{model.3} parent=5 // pred_region
        %s147 = ssub.s32 %s12, 1
        %s148 = smul.u32 8, %s17
        %p149 = scmp.lt.s32.totalorder %s148, 15
        %s150 = scalar_select %p149, %s148, 15
        %s151 = smul.addr %s150, 3
        %s152 = smul.addr %s151, 4
        %s153 = scalar_lea.vmem %s0, %s152
        %p154 = pneg %p38
        %p155 = pneg %p35
        %p156 = pneg %p59
        %p157 = pneg %p56
        %p158 = pneg %p80
        %p159 = pneg %p77
        %p160 = pneg %p106
        %p161 = pneg %p103
        %s162 = sand.u32 %s93, 1
        %s163 = scalar_lea.sflag [#allocation3], %s162
        %s164 = sand.u32 %s93, 1
        %s165 = smul.addr %s164, 64
        %s166 = scalar_lea.vmem [#allocation2], %s165
        %s167 = smul.u32 8, %s17
        %p168 = scmp.lt.s32.totalorder %s167, 15
        %s169 = scalar_select %p168, %s167, 15
        %s170 = smul.addr %s169, 3
        %s171 = smul.addr %s170, 4
        %s172 = scalar_lea.vmem %s0, %s171
        %s173 = smul.u32 8, %s17
        %s174 = smul.u32 8, %s17
        %v176 = vld [vmem:[%s172] sm:$0xff]
        %v177 = vld [vmem:[%s172 + $0x8] sm:$0xf]
        %v178 = vld [vmem:[%s172 + $0xc] sm:$0xff]
        %v179 = vld [vmem:[%s172 + $0x14] sm:$0xf]
        %v180 = vld [vmem:[%s172 + $0x18] sm:$0xff]
        %v181 = vld [vmem:[%s172 + $0x20] sm:$0xf]
        %v182 = vld [vmem:[%s172 + $0x24] sm:$0xff]
        %v183 = vld [vmem:[%s172 + $0x2c] sm:$0xf]
        %v184 = vld [vmem:[%s172 + $0x30] sm:$0xff]
        %v185 = vld [vmem:[%s172 + $0x38] sm:$0xf]
        %v186 = vld [vmem:[%s172 + $0x3c] sm:$0xff]
        %v187 = vld [vmem:[%s172 + $0x44] sm:$0xf]
        %v188 = vld [vmem:[%s172 + $0x48] sm:$0xff]
        %v189 = vld [vmem:[%s172 + $0x50] sm:$0xf]
        %v190 = vld [vmem:[%s172 + $0x54] sm:$0xff]
        %v191 = vld [vmem:[%s172 + $0x5c] sm:$0xf]
        %v192 = vld [vmem:[%s1] sm:$0xff]
        %v193 = vld [vmem:[%s1 + $0x8] sm:$0xff]
        %v194 = vld [vmem:[%s1 + $0x10] sm:$0xff]
        %v195 = vld [vmem:[%s1 + $0x18] sm:$0xff]
        %v196 = vld [vmem:[%s1 + $0x20] sm:$0xff]
        %v197 = vld [vmem:[%s1 + $0x28] sm:$0xff]
        %v198 = vld [vmem:[%s1 + $0x30] sm:$0xff]
        %v199 = vld [vmem:[%s1 + $0x38] sm:$0xff]
        %v200 = vld [vmem:[%s1 + $0x40] sm:$0xff]
        %v201 = vld [vmem:[%s1 + $0x48] sm:$0xff]
        %v202 = vld [vmem:[%s1 + $0x50] sm:$0xff]
        %v203 = vld [vmem:[%s1 + $0x58] sm:$0xff]
        %v204 = vld [vmem:[%s1 + $0x60] sm:$0xff]
        %v205 = vld [vmem:[%s1 + $0x68] sm:$0xff]
        %v206 = vld [vmem:[%s1 + $0x70] sm:$0xff]
        %v207 = vld [vmem:[%s1 + $0x78] sm:$0xff]
        %v208 = vld [vmem:[%s1 + $0x80] sm:$0xff]
        %v209 = vld [vmem:[%s1 + $0x88] sm:$0xff]
        %v210 = vld [vmem:[%s1 + $0x90] sm:$0xff]
        %v211 = vld [vmem:[%s1 + $0x98] sm:$0xff]
        %v212 = vld [vmem:[%s1 + $0xa0] sm:$0xff]
        %v213 = vld [vmem:[%s1 + $0xa8] sm:$0xff]
        %v214 = vld [vmem:[%s1 + $0xb0] sm:$0xff]
        %v215 = vld [vmem:[%s1 + $0xb8] sm:$0xff]
        %v216 = vld [vmem:[%s1 + $0xc0] sm:$0xff]
        %v217 = vld [vmem:[%s1 + $0xc8] sm:$0xff]
        %v218 = vld [vmem:[%s1 + $0xd0] sm:$0xff]
        %v219 = vld [vmem:[%s1 + $0xd8] sm:$0xff]
        %v220 = vld [vmem:[%s1 + $0xe0] sm:$0xff]
        %v221 = vld [vmem:[%s1 + $0xe8] sm:$0xff]
        %v222 = vld [vmem:[%s1 + $0xf0] sm:$0xff]
        %v223 = vld [vmem:[%s1 + $0xf8] sm:$0xff]
        %v224 = vld [vmem:[%s1 + $0x100] sm:$0xff]
        %v225 = vld [vmem:[%s1 + $0x108] sm:$0xff]
        %v226 = vld [vmem:[%s1 + $0x110] sm:$0xff]
        %v227 = vld [vmem:[%s1 + $0x118] sm:$0xff]
        %v228 = vld [vmem:[%s1 + $0x120] sm:$0xff]
        %v229 = vld [vmem:[%s1 + $0x128] sm:$0xff]
        %v230 = vld [vmem:[%s1 + $0x130] sm:$0xff]
        %v231 = vld [vmem:[%s1 + $0x138] sm:$0xff]
        %v232 = vld [vmem:[%s1 + $0x140] sm:$0xff]
        %v233 = vld [vmem:[%s1 + $0x148] sm:$0xff]
        %v234 = vld [vmem:[%s1 + $0x150] sm:$0xff]
        %v235 = vld [vmem:[%s1 + $0x158] sm:$0xff]
        %v236 = vld [vmem:[%s1 + $0x160] sm:$0xff]
        %v237 = vld [vmem:[%s1 + $0x168] sm:$0xff]
        %v238 = vld [vmem:[%s1 + $0x170] sm:$0xff]
        %v239 = vld [vmem:[%s1 + $0x178] sm:$0xff]
        %v240 = vld [vmem:[%s2] ss:$2 sm:$0x3]
        %v242 = vlaneseq
        %v243 = vshrl.u32 %v242, 7
        %v244 = vsub.s32 0, %v243
        %v245 = vrot.slane %v240, %v244
        %v246 = vlaneseq
        %v247 = vshrl.u32 %v246, 7
        %v248 = vsub.s32 1, %v247
        %v249 = vrot.slane %v240, %v248
        %v268 = vunpack.c.l.b16 %v176
        %v269 = vunpack.c.h.b16 %v176
        %v270 = vunpack.c.l.b16 %v177
        %v271 = vunpack.c.l.b16 %v178
        %v272 = vunpack.c.h.b16 %v178
        %v273 = vunpack.c.l.b16 %v179
        %v274 = vunpack.c.l.b16 %v180
        %v275 = vunpack.c.h.b16 %v180
        %v276 = vunpack.c.l.b16 %v181
        %v277 = vunpack.c.l.b16 %v182
        %v278 = vunpack.c.h.b16 %v182
        %v279 = vunpack.c.l.b16 %v183
        %v280 = vunpack.c.l.b16 %v184
        %v281 = vunpack.c.h.b16 %v184
        %v282 = vunpack.c.l.b16 %v185
        %v283 = vunpack.c.l.b16 %v186
        %v284 = vunpack.c.h.b16 %v186
        %v285 = vunpack.c.l.b16 %v187
        %v286 = vunpack.c.l.b16 %v188
        %v287 = vunpack.c.h.b16 %v188
        %v288 = vunpack.c.l.b16 %v189
        %v289 = vunpack.c.l.b16 %v190
        %v290 = vunpack.c.h.b16 %v190
        %v291 = vunpack.c.l.b16 %v191
        %v292 = vpack.c.b16 %v271, %v268
        %v293 = vpack.c.b16 %v272, %v269
        %v294 = vpack.c.b16 %v273, %v270
        %v295 = vpack.c.b16 %v277, %v274
        %v296 = vpack.c.b16 %v278, %v275
        %v297 = vpack.c.b16 %v279, %v276
        %v298 = vpack.c.b16 %v283, %v280
        %v299 = vpack.c.b16 %v284, %v281
        %v300 = vpack.c.b16 %v285, %v282
        %v301 = vpack.c.b16 %v289, %v286
        %v302 = vpack.c.b16 %v290, %v287
        %v303 = vpack.c.b16 %v291, %v288
        %v364 = vunpack.c.l.b16 %v192
        %v365 = vunpack.c.h.b16 %v192
        %v366 = vunpack.c.l.b16 %v193
        %v367 = vunpack.c.h.b16 %v193
        %v368 = vunpack.c.l.b16 %v194
        %v369 = vunpack.c.h.b16 %v194
        %v370 = vunpack.c.l.b16 %v195
        %v371 = vunpack.c.h.b16 %v195
        %v372 = vunpack.c.l.b16 %v196
        %v373 = vunpack.c.h.b16 %v196
        %v374 = vunpack.c.l.b16 %v197
        %v375 = vunpack.c.h.b16 %v197
        %v376 = vunpack.c.l.b16 %v198
        %v377 = vunpack.c.h.b16 %v198
        %v378 = vunpack.c.l.b16 %v199
        %v379 = vunpack.c.h.b16 %v199
        %v380 = vunpack.c.l.b16 %v200
        %v381 = vunpack.c.h.b16 %v200
        %v382 = vunpack.c.l.b16 %v201
        %v383 = vunpack.c.h.b16 %v201
        %v384 = vunpack.c.l.b16 %v202
        %v385 = vunpack.c.h.b16 %v202
        %v386 = vunpack.c.l.b16 %v203
        %v387 = vunpack.c.h.b16 %v203
        %v388 = vunpack.c.l.b16 %v204
        %v389 = vunpack.c.h.b16 %v204
        %v390 = vunpack.c.l.b16 %v205
        %v391 = vunpack.c.h.b16 %v205
        %v392 = vunpack.c.l.b16 %v206
        %v393 = vunpack.c.h.b16 %v206
        %v394 = vunpack.c.l.b16 %v207
        %v395 = vunpack.c.h.b16 %v207
        %v396 = vunpack.c.l.b16 %v208
        %v397 = vunpack.c.h.b16 %v208
        %v398 = vunpack.c.l.b16 %v209
        %v399 = vunpack.c.h.b16 %v209
        %v400 = vunpack.c.l.b16 %v210
        %v401 = vunpack.c.h.b16 %v210
        %v402 = vunpack.c.l.b16 %v211
        %v403 = vunpack.c.h.b16 %v211
        %v404 = vunpack.c.l.b16 %v212
        %v405 = vunpack.c.h.b16 %v212
        %v406 = vunpack.c.l.b16 %v213
        %v407 = vunpack.c.h.b16 %v213
        %v408 = vunpack.c.l.b16 %v214
        %v409 = vunpack.c.h.b16 %v214
        %v410 = vunpack.c.l.b16 %v215
        %v411 = vunpack.c.h.b16 %v215
        %v412 = vunpack.c.l.b16 %v216
        %v413 = vunpack.c.h.b16 %v216
        %v414 = vunpack.c.l.b16 %v217
        %v415 = vunpack.c.h.b16 %v217
        %v416 = vunpack.c.l.b16 %v218
        %v417 = vunpack.c.h.b16 %v218
        %v418 = vunpack.c.l.b16 %v219
        %v419 = vunpack.c.h.b16 %v219
        %v420 = vunpack.c.l.b16 %v220
        %v421 = vunpack.c.h.b16 %v220
        %v422 = vunpack.c.l.b16 %v221
        %v423 = vunpack.c.h.b16 %v221
        %v424 = vunpack.c.l.b16 %v222
        %v425 = vunpack.c.h.b16 %v222
        %v426 = vunpack.c.l.b16 %v223
        %v427 = vunpack.c.h.b16 %v223
        %v428 = vunpack.c.l.b16 %v224
        %v429 = vunpack.c.h.b16 %v224
        %v430 = vunpack.c.l.b16 %v225
        %v431 = vunpack.c.h.b16 %v225
        %v432 = vunpack.c.l.b16 %v226
        %v433 = vunpack.c.h.b16 %v226
        %v434 = vunpack.c.l.b16 %v227
        %v435 = vunpack.c.h.b16 %v227
        %v436 = vunpack.c.l.b16 %v228
        %v437 = vunpack.c.h.b16 %v228
        %v438 = vunpack.c.l.b16 %v229
        %v439 = vunpack.c.h.b16 %v229
        %v440 = vunpack.c.l.b16 %v230
        %v441 = vunpack.c.h.b16 %v230
        %v442 = vunpack.c.l.b16 %v231
        %v443 = vunpack.c.h.b16 %v231
        %v444 = vunpack.c.l.b16 %v232
        %v445 = vunpack.c.h.b16 %v232
        %v446 = vunpack.c.l.b16 %v233
        %v447 = vunpack.c.h.b16 %v233
        %v448 = vunpack.c.l.b16 %v234
        %v449 = vunpack.c.h.b16 %v234
        %v450 = vunpack.c.l.b16 %v235
        %v451 = vunpack.c.h.b16 %v235
        %v452 = vunpack.c.l.b16 %v236
        %v453 = vunpack.c.h.b16 %v236
        %v454 = vunpack.c.l.b16 %v237
        %v455 = vunpack.c.h.b16 %v237
        %v456 = vunpack.c.l.b16 %v238
        %v457 = vunpack.c.h.b16 %v238
        %v458 = vunpack.c.l.b16 %v239
        %v459 = vunpack.c.h.b16 %v239
        %v460 = vpack.c.b16 %v366, %v364
        %v461 = vpack.c.b16 %v367, %v365
        %v462 = vpack.c.b16 %v370, %v368
        %v463 = vpack.c.b16 %v371, %v369
        %v464 = vpack.c.b16 %v374, %v372
        %v465 = vpack.c.b16 %v375, %v373
        %v466 = vpack.c.b16 %v378, %v376
        %v467 = vpack.c.b16 %v379, %v377
        %v468 = vpack.c.b16 %v382, %v380
        %v469 = vpack.c.b16 %v383, %v381
        %v470 = vpack.c.b16 %v386, %v384
        %v471 = vpack.c.b16 %v387, %v385
        %v472 = vpack.c.b16 %v390, %v388
        %v473 = vpack.c.b16 %v391, %v389
        %v474 = vpack.c.b16 %v394, %v392
        %v475 = vpack.c.b16 %v395, %v393
        %v476 = vpack.c.b16 %v398, %v396
        %v477 = vpack.c.b16 %v399, %v397
        %v478 = vpack.c.b16 %v402, %v400
        %v479 = vpack.c.b16 %v403, %v401
        %v480 = vpack.c.b16 %v406, %v404
        %v481 = vpack.c.b16 %v407, %v405
        %v482 = vpack.c.b16 %v410, %v408
        %v483 = vpack.c.b16 %v411, %v409
        %v484 = vpack.c.b16 %v414, %v412
        %v485 = vpack.c.b16 %v415, %v413
        %v486 = vpack.c.b16 %v418, %v416
        %v487 = vpack.c.b16 %v419, %v417
        %v488 = vpack.c.b16 %v422, %v420
        %v489 = vpack.c.b16 %v423, %v421
        %v490 = vpack.c.b16 %v426, %v424
        %v491 = vpack.c.b16 %v427, %v425
        %v492 = vpack.c.b16 %v430, %v428
        %v493 = vpack.c.b16 %v431, %v429
        %v494 = vpack.c.b16 %v434, %v432
        %v495 = vpack.c.b16 %v435, %v433
        %v496 = vpack.c.b16 %v438, %v436
        %v497 = vpack.c.b16 %v439, %v437
        %v498 = vpack.c.b16 %v442, %v440
        %v499 = vpack.c.b16 %v443, %v441
        %v500 = vpack.c.b16 %v446, %v444
        %v501 = vpack.c.b16 %v447, %v445
        %v502 = vpack.c.b16 %v450, %v448
        %v503 = vpack.c.b16 %v451, %v449
        %v504 = vpack.c.b16 %v454, %v452
        %v505 = vpack.c.b16 %v455, %v453
        %v506 = vpack.c.b16 %v458, %v456
        %v507 = vpack.c.b16 %v459, %v457
        %556 = vmatprep.subr.bf16.mxu0 %v461
        %557 = vmatpush1.bf16.msra.mxu0 %v460
        %558 = vmatprep.subr.bf16.mxu0 %v463
        %559 = vmatpush1.bf16.msra.mxu0 %v462
        %560 = vmatprep.subr.bf16.mxu0 %v465
        %561 = vmatpush1.bf16.msra.mxu0 %v464
        %562 = vmatprep.subr.bf16.mxu0 %v467
        %563 = vmatpush1.bf16.msra.mxu0 %v466
        %564 = vmatprep.subr.bf16.mxu0 %v469
        %565 = vmatpush1.bf16.msra.mxu0 %v468
        %566 = vmatprep.subr.bf16.mxu0 %v471
        %567 = vmatpush1.bf16.msra.mxu0 %v470
        %568 = vmatprep.subr.bf16.mxu0 %v473
        %569 = vmatpush1.bf16.msra.mxu0 %v472
        %570 = vmatprep.subr.bf16.mxu0 %v475
        %571 = vmatpush1.bf16.msra.mxu0 %v474
        %572 = vmatprep.subr.bf16.mxu0 %v477
        %573 = vmatpush1.bf16.msra.mxu0 %v476
        %574 = vmatprep.subr.bf16.mxu0 %v479
        %575 = vmatpush1.bf16.msra.mxu0 %v478
        %576 = vmatprep.subr.bf16.mxu0 %v481
        %577 = vmatpush1.bf16.msra.mxu0 %v480
        %578 = vmatprep.subr.bf16.mxu0 %v483
        %579 = vmatpush1.bf16.msra.mxu0 %v482
        %580 = vmatprep.subr.bf16.mxu0 %v485
        %581 = vmatpush1.bf16.msra.mxu0 %v484
        %582 = vmatprep.subr.bf16.mxu0 %v487
        %583 = vmatpush1.bf16.msra.mxu0 %v486
        %584 = vmatprep.subr.bf16.mxu0 %v489
        %585 = vmatpush1.bf16.msra.mxu0 %v488
        %586 = vmatprep.subr.bf16.mxu0 %v491
        %587 = vmatpush1.bf16.msra.mxu0 %v490
        %588 = vmatprep.mubr.bf16.mxu0 %v293
        %589 = vmatmul.mubr.bf16.gmra.mrb[0].mxu0 %v292
        %v590 = vpop.f32.mrb[0].mxu0
        %v591 = vadd.f32 %v245, %v590
        %v592 = vpop.f32.mrb[0].mxu0
        %v593 = vadd.f32 %v249, %v592
        %v594 = vpop.f32.mrb[0].mxu0
        %v595 = vadd.f32 %v245, %v594
        %v596 = vpop.f32.mrb[0].mxu0
        %v597 = vadd.f32 %v249, %v596
        %598 = vmatprep.mubr.bf16.mxu0 %v296
        %599 = vmatmul.mubr.bf16.gmra.mrb[0].mxu0 %v295
        %v600 = vpop.f32.mrb[0].mxu0
        %v601 = vadd.f32 %v245, %v600
        %v602 = vpop.f32.mrb[0].mxu0
        %v603 = vadd.f32 %v249, %v602
        %v604 = vpop.f32.mrb[0].mxu0
        %v605 = vadd.f32 %v245, %v604
        %v606 = vpop.f32.mrb[0].mxu0
        %v607 = vadd.f32 %v249, %v606
        %608 = vmatprep.mubr.bf16.mxu0 %v299
        %609 = vmatmul.mubr.bf16.gmra.mrb[0].mxu0 %v298
        %v610 = vpop.f32.mrb[0].mxu0
        %v611 = vadd.f32 %v245, %v610
        %v612 = vpop.f32.mrb[0].mxu0
        %v613 = vadd.f32 %v249, %v612
        %v614 = vpop.f32.mrb[0].mxu0
        %v615 = vadd.f32 %v245, %v614
        %v616 = vpop.f32.mrb[0].mxu0
        %v617 = vadd.f32 %v249, %v616
        %618 = vmatprep.mubr.bf16.mxu0 %v302
        %619 = vmatmul.mubr.bf16.gmra.mrb[0].mxu0 %v301
        %v620 = vpop.f32.mrb[0].mxu0
        %v621 = vadd.f32 %v245, %v620
        %v622 = vpop.f32.mrb[0].mxu0
        %v623 = vadd.f32 %v249, %v622
        %v624 = vpop.f32.mrb[0].mxu0
        %v625 = vadd.f32 %v245, %v624
        %v626 = vpop.f32.mrb[0].mxu0
        %v627 = vadd.f32 %v249, %v626
        %628 = vdwg.mxu0
        %629 = vmatprep.subr.bf16.mxu0 %v493
        %630 = vmatpush1.bf16.msra.mxu0 %v492
        %631 = vmatprep.subr.bf16.mxu0 %v495
        %632 = vmatpush1.bf16.msra.mxu0 %v494
        %633 = vmatprep.subr.bf16.mxu0 %v497
        %634 = vmatpush1.bf16.msra.mxu0 %v496
        %635 = vmatprep.subr.bf16.mxu0 %v499
        %636 = vmatpush1.bf16.msra.mxu0 %v498
        %637 = vmatprep.subr.bf16.mxu0 %v501
        %638 = vmatpush1.bf16.msra.mxu0 %v500
        %639 = vmatprep.subr.bf16.mxu0 %v503
        %640 = vmatpush1.bf16.msra.mxu0 %v502
        %641 = vmatprep.subr.bf16.mxu0 %v505
        %642 = vmatpush1.bf16.msra.mxu0 %v504
        %643 = vmatprep.subr.bf16.mxu0 %v507
        %644 = vmatpush1.bf16.msra.mxu0 %v506
        %645 = vmatprep.subr.bf16.mxu0 0
        %646 = vmatpush1.bf16.msra.mxu0 0
        %647 = vmatprep.subr.bf16.mxu0 0
        %648 = vmatpush1.bf16.msra.mxu0 0
        %649 = vmatprep.subr.bf16.mxu0 0
        %650 = vmatpush1.bf16.msra.mxu0 0
        %651 = vmatprep.subr.bf16.mxu0 0
        %652 = vmatpush1.bf16.msra.mxu0 0
        %653 = vmatprep.subr.bf16.mxu0 0
        %654 = vmatpush1.bf16.msra.mxu0 0
        %655 = vmatprep.subr.bf16.mxu0 0
        %656 = vmatpush1.bf16.msra.mxu0 0
        %657 = vmatprep.subr.bf16.mxu0 0
        %658 = vmatpush1.bf16.msra.mxu0 0
        %659 = vmatprep.subr.bf16.mxu0 0
        %660 = vmatpush1.bf16.msra.mxu0 0
        %661 = vmatprep.mubr.bf16.mxu0 0
        %662 = vmatmul.mubr.bf16.gmra.mrb[0].mxu0 %v294
        %v663 = vpop.f32.mrb[0].mxu0
        %v664 = vadd.f32 %v591, %v663
        %v665 = vpop.f32.mrb[0].mxu0
        %v666 = vadd.f32 %v593, %v665
        %v667 = vpop.f32.mrb[0].mxu0
        %v668 = vadd.f32 %v595, %v667
        %v669 = vpop.f32.mrb[0].mxu0
        %v670 = vadd.f32 %v597, %v669
        %671 = vmatprep.mubr.bf16.mxu0 0
        %672 = vmatmul.mubr.bf16.gmra.mrb[0].mxu0 %v297
        %v673 = vpop.f32.mrb[0].mxu0
        %v674 = vadd.f32 %v601, %v673
        %v675 = vpop.f32.mrb[0].mxu0
        %v676 = vadd.f32 %v603, %v675
        %v677 = vpop.f32.mrb[0].mxu0
        %v678 = vadd.f32 %v605, %v677
        %v679 = vpop.f32.mrb[0].mxu0
        %v680 = vadd.f32 %v607, %v679
        %681 = vmatprep.mubr.bf16.mxu0 0
        %682 = vmatmul.mubr.bf16.gmra.mrb[0].mxu0 %v300
        %v683 = vpop.f32.mrb[0].mxu0
        %v684 = vadd.f32 %v611, %v683
        %v685 = vpop.f32.mrb[0].mxu0
        %v686 = vadd.f32 %v613, %v685
        %v687 = vpop.f32.mrb[0].mxu0
        %v688 = vadd.f32 %v615, %v687
        %v689 = vpop.f32.mrb[0].mxu0
        %v690 = vadd.f32 %v617, %v689
        %691 = vmatprep.mubr.bf16.mxu0 0
        %692 = vmatmul.mubr.bf16.gmra.mrb[0].mxu0 %v303
        %v693 = vpop.f32.mrb[0].mxu0
        %v694 = vadd.f32 %v621, %v693
        %v695 = vpop.f32.mrb[0].mxu0
        %v696 = vadd.f32 %v623, %v695
        %v697 = vpop.f32.mrb[0].mxu0
        %v698 = vadd.f32 %v625, %v697
        %v699 = vpop.f32.mrb[0].mxu0
        %v700 = vadd.f32 %v627, %v699
        %701 = vdwg.mxu0
        %vm702 = vcmp.gt.f32.partialorder %v664, 0.0
        %vm703 = vcmp.gt.f32.partialorder %v666, 0.0
        %vm704 = vcmp.gt.f32.partialorder %v668, 0.0
        %vm705 = vcmp.gt.f32.partialorder %v670, 0.0
        %vm706 = vcmp.gt.f32.partialorder %v674, 0.0
        %vm707 = vcmp.gt.f32.partialorder %v676, 0.0
        %vm708 = vcmp.gt.f32.partialorder %v678, 0.0
        %vm709 = vcmp.gt.f32.partialorder %v680, 0.0
        %vm710 = vcmp.gt.f32.partialorder %v684, 0.0
        %vm711 = vcmp.gt.f32.partialorder %v686, 0.0
        %vm712 = vcmp.gt.f32.partialorder %v688, 0.0
        %vm713 = vcmp.gt.f32.partialorder %v690, 0.0
        %vm714 = vcmp.gt.f32.partialorder %v694, 0.0
        %vm715 = vcmp.gt.f32.partialorder %v696, 0.0
        %vm716 = vcmp.gt.f32.partialorder %v698, 0.0
        %vm717 = vcmp.gt.f32.partialorder %v700, 0.0
        %s718 = scalar_lea.vmem %s2, 1
        %v719 = vld [vmem:[%s718] ss:$2 sm:$0x3]
        %v721 = vlaneseq
        %v722 = vshrl.u32 %v721, 7
        %v723 = vsub.s32 0, %v722
        %v724 = vrot.slane %v719, %v723
        %v725 = vlaneseq
        %v726 = vshrl.u32 %v725, 7
        %v727 = vsub.s32 1, %v726
        %v728 = vrot.slane %v719, %v727
        %v731 = vmul.f32 %v724, %v664
        %v732 = vmul.f32 %v728, %v666
        %v733 = vmul.f32 %v724, %v668
        %v734 = vmul.f32 %v728, %v670
        %v735 = vmul.f32 %v724, %v674
        %v736 = vmul.f32 %v728, %v676
        %v737 = vmul.f32 %v724, %v678
        %v738 = vmul.f32 %v728, %v680
        %v739 = vmul.f32 %v724, %v684
        %v740 = vmul.f32 %v728, %v686
        %v741 = vmul.f32 %v724, %v688
        %v742 = vmul.f32 %v728, %v690
        %v743 = vmul.f32 %v724, %v694
        %v744 = vmul.f32 %v728, %v696
        %v745 = vmul.f32 %v724, %v698
        %v746 = vmul.f32 %v728, %v700
        %v747 = vsel %vm702, %v664, %v731
        %v748 = vsel %vm703, %v666, %v732
        %v749 = vsel %vm704, %v668, %v733
        %v750 = vsel %vm705, %v670, %v734
        %v751 = vsel %vm706, %v674, %v735
        %v752 = vsel %vm707, %v676, %v736
        %v753 = vsel %vm708, %v678, %v737
        %v754 = vsel %vm709, %v680, %v738
        %v755 = vsel %vm710, %v684, %v739
        %v756 = vsel %vm711, %v686, %v740
        %v757 = vsel %vm712, %v688, %v741
        %v758 = vsel %vm713, %v690, %v742
        %v759 = vsel %vm714, %v694, %v743
        %v760 = vsel %vm715, %v696, %v744
        %v761 = vsel %vm716, %v698, %v745
        %v762 = vsel %vm717, %v700, %v746
        %v763 = vpack.c.bf16 %v749, %v747
        %v764 = vpack.c.bf16 %v750, %v748
        %v765 = vpack.c.bf16 %v753, %v751
        %v766 = vpack.c.bf16 %v754, %v752
        %v767 = vpack.c.bf16 %v757, %v755
        %v768 = vpack.c.bf16 %v758, %v756
        %v769 = vpack.c.bf16 %v761, %v759
        %v770 = vpack.c.bf16 %v762, %v760
        %v779 = vunpack.c.l.b16 %v763
        %v780 = vunpack.c.l.b16 %v764
        %v781 = vunpack.c.h.b16 %v763
        %v782 = vunpack.c.h.b16 %v764
        %v783 = vunpack.c.l.b16 %v765
        %v784 = vunpack.c.l.b16 %v766
        %v785 = vunpack.c.h.b16 %v765
        %v786 = vunpack.c.h.b16 %v766
        %v787 = vunpack.c.l.b16 %v767
        %v788 = vunpack.c.l.b16 %v768
        %v789 = vunpack.c.h.b16 %v767
        %v790 = vunpack.c.h.b16 %v768
        %v791 = vunpack.c.l.b16 %v769
        %v792 = vunpack.c.l.b16 %v770
        %v793 = vunpack.c.h.b16 %v769
        %v794 = vunpack.c.h.b16 %v770
        %v795 = vpack.c.b16 %v780, %v779
        %v796 = vpack.c.b16 %v782, %v781
        %v797 = vpack.c.b16 %v784, %v783
        %v798 = vpack.c.b16 %v786, %v785
        %v799 = vpack.c.b16 %v788, %v787
        %v800 = vpack.c.b16 %v790, %v789
        %v801 = vpack.c.b16 %v792, %v791
        %v802 = vpack.c.b16 %v794, %v793
        %811 = vst [vmem:[%s166] sm:$0xff] %v795
        %812 = vst [vmem:[%s166 + $0x8] sm:$0xff] %v796
        %813 = vst [vmem:[%s166 + $0x10] sm:$0xff] %v797
        %814 = vst [vmem:[%s166 + $0x18] sm:$0xff] %v798
        %815 = vst [vmem:[%s166 + $0x20] sm:$0xff] %v799
        %816 = vst [vmem:[%s166 + $0x28] sm:$0xff] %v800
        %817 = vst [vmem:[%s166 + $0x30] sm:$0xff] %v801
        %818 = vst [vmem:[%s166 + $0x38] sm:$0xff] %v802
        %s819 = sand.u32 %s93, 1
        %s820 = scalar_lea.sflag [#allocation3], %s819
        %s821 = sand.u32 %s93, 1
        %s822 = smul.addr %s821, 64
        %s823 = scalar_lea.vmem [#allocation2], %s822
        // Predicated region
        $region33: #{model.3} parent=31 // pred_check
          %p824 = pneg %p103
        $region34: #{model.3} parent=31 // pred_check_branch
          %826 = sbr.rel (%p824) target = $region36
        $region35: #{model.3} parent=31 // pred_region
          %s827 = smul.u32 8, %s17
          %s829 = ssub.s32 1024, 1024
          %830 = vsyncadd %s820, %s829
          %s831 = smul.addr %s827, 2
          %s832 = smul.addr %s831, 64
          %s833 = scalar_lea.hbm %s3, %s832
          %s834 = sshll.u32 %s823, 4
          %s835 = int_to_ptr.vmem [resolvable:$true] %s834
          %840 = dma.vmem_to_hbm [thread:$0]  %s835, 1024, %s833, %s820, 128, 128, 8
        $region36: #{model.3} parent=31 // pred_fallthru
          _
      $region32: #{model.3} parent=5 // pred_fallthru
        _
      %p841 = scmp.le.s32.totalorder 2, %s12
      // Predicated region
      $region37: #{model.3} parent=5 // pred_check
        %p842 = pneg %p841
      $region38: #{model.3} parent=5 // pred_check_branch
        %844 = sbr.rel (%p842) target = $region40
      $region39: #{model.3} parent=5 // pred_region
        %s845 = ssub.s32 %s12, 2
        // Predicated region
        $region41: #{model.3} parent=39 // pred_check
          %p846 = pneg %p109
        $region42: #{model.3} parent=39 // pred_check_branch
          %848 = sbr.rel (%p846) target = $region44
        $region43: #{model.3} parent=39 // pred_region
          %s849 = sand.u32 %s94, 1
          %s850 = scalar_lea.sflag [#allocation3], %s849
          %s851 = sand.u32 %s94, 1
          %s852 = smul.addr %s851, 64
          %s853 = scalar_lea.vmem [#allocation2], %s852
          %854 = dma.done %s850, 1024
        $region44: #{model.3} parent=39 // pred_fallthru
          _
      $region40: #{model.3} parent=5 // pred_fallthru
        _
    $region6: #{model.3} parent=1 // loop_footer
      %s16 = sadd.s32 1, %s12
    $region7: #{model.3} parent=1 // loop_footer_branch
      %11 = sbr.rel target = $region3
    $region8: #{model.3} parent=1 // loop_exit
      _
    %855 = vsyncpa [#allocation3], 1
    %s856 = scalar_lea.sflag [#allocation3], 1
    %857 = vsyncpa %s856, 1

</llo_original>
